<compile_context>
chip_gen: v7x
topology: tpu7x:2x2x1
jax: 0.10.0
libtpu: 0.0.40
codegen_flags: <defaults>
</compile_context>

<pallas_src>
import math

import jax
import jax.numpy as jnp
from jax.experimental import pallas as pl
from jax.experimental.pallas import tpu as pltpu


# ----------------------------------------------------------------------------
# Fused kernel: masked mean + q/k/v projections + masked softmax + weighted
# sum + classifier. Everything (weights + activations, a few KiB) is VMEM
# resident; single invocation, no grid.
# ----------------------------------------------------------------------------
def _fused_attention_kernel(x_ref, mask_ref, wq_t_ref, wkv_t_ref, wc_t_ref,
                            bc_ref, cste_ref, pred_ref, attn_ref, kv_ref):
    T, B, D = x_ref.shape
    inv_sqrt_d = jnp.float32(1.0 / math.sqrt(D))

    x = x_ref[...]                                    # (T, B, D)
    mask = mask_ref[...]                              # (T, B), 1.0 == padded
    nm3 = (1.0 - mask)[:, :, None]                    # (T, B, 1)

    # compute_masked_mean: sums over the leading (time) axis are plain VPU adds.
    num = jnp.sum(nm3 * x, axis=0)                    # (B, D)
    den = jnp.sum(nm3, axis=0)                        # (B, 1)
    mean_x = num * pl.reciprocal(den, approx=True)    # (B, D)

    # q projection (Linear, no bias) on the MXU.
    q = jnp.dot(mean_x, wq_t_ref[...], preferred_element_type=jnp.float32)   # (B, D)

    # k and v projections: one fused (B, D) x (D, 2D) MXU dot per time step.
    # T is small & static -> this Python loop is fully unrolled at trace time.
    # This avoids the (T*B, D) reshape (a relayout copy since B % 8 != 0).
    for t in range(T):
        kv_ref[t] = jnp.dot(x_ref[t], wkv_t_ref[...],
                            preferred_element_type=jnp.float32)              # (B, 2D)

    k = kv_ref[:, :, :D]                              # (T, B, D)
    v = kv_ref[:, :, D:]                              # (T, B, D)

    # attention logits: per-(t, b) dot of q[b] and k[t, b]; + cste, / sqrt(D),
    # padded positions -> -inf (matches the PyTorch masking semantics).
    cste = cste_ref[0]                                # scalar from SMEM
    scores = jnp.sum(q[None, :, :] * k, axis=-1)      # (T, B)
    logits = (cste + scores) * inv_sqrt_d
    logits = jnp.where(mask > 0.5, jnp.float32(-jnp.inf), logits)

    # softmax over the time axis (dim 0).
    m = jnp.max(logits, axis=0, keepdims=True)
    e = jnp.exp(logits - m)
    attn = e * pl.reciprocal(jnp.sum(e, axis=0, keepdims=True), approx=True)  # (T, B)

    # weighted sum of values over time (VPU adds) + classifier (MXU).
    out = jnp.sum(attn[:, :, None] * v, axis=0)       # (B, D)
    pred = jnp.dot(out, wc_t_ref[...], preferred_element_type=jnp.float32) + bc_ref[...]

    pred_ref[...] = pred
    attn_ref[...] = attn


# ----------------------------------------------------------------------------
# One-time parameter packing (hoisted out of the per-call path).
# ----------------------------------------------------------------------------
def prepare_params(params):
    out_dim = params["wc"].shape[0]
    return dict(
        wq_t=jnp.asarray(params["wq"], jnp.float32).T,                        # (D, D)
        wkv_t=jnp.concatenate(
            [jnp.asarray(params["wk"], jnp.float32).T,
             jnp.asarray(params["wv"], jnp.float32).T], axis=1),              # (D, 2D)
        wc_t=jnp.asarray(params["wc"], jnp.float32).T,                        # (D, out)
        bc=jnp.asarray(params["bc"], jnp.float32).reshape(1, out_dim),        # (1, out)
        cste=jnp.asarray(params["cste"], jnp.float32).reshape(1),             # (1,)
    )


# ----------------------------------------------------------------------------
# Forward pass: one pallas_call (plus a mask cast and two metadata reshapes).
# ----------------------------------------------------------------------------
@jax.jit
def attention_model_q3(prep, x, mask_pad):
    T, B, D = x.shape
    out_dim = prep["wc_t"].shape[1]
    mask_f = mask_pad.astype(jnp.float32)

    pred, attn = pl.pallas_call(
        _fused_attention_kernel,
        out_shape=(jax.ShapeDtypeStruct((B, out_dim), jnp.float32),
                   jax.ShapeDtypeStruct((T, B), jnp.float32)),
        in_specs=[
            pl.BlockSpec(memory_space=pltpu.MemorySpace.VMEM),   # x
            pl.BlockSpec(memory_space=pltpu.MemorySpace.VMEM),   # mask
            pl.BlockSpec(memory_space=pltpu.MemorySpace.VMEM),   # wq_t
            pl.BlockSpec(memory_space=pltpu.MemorySpace.VMEM),   # wkv_t
            pl.BlockSpec(memory_space=pltpu.MemorySpace.VMEM),   # wc_t
            pl.BlockSpec(memory_space=pltpu.MemorySpace.VMEM),   # bc
            pl.BlockSpec(memory_space=pltpu.MemorySpace.SMEM),   # cste (scalar)
        ],
        out_specs=(pl.BlockSpec(memory_space=pltpu.MemorySpace.VMEM),
                   pl.BlockSpec(memory_space=pltpu.MemorySpace.VMEM)),
        scratch_shapes=[pltpu.VMEM((T, B, 2 * D), jnp.float32)],   # k|v buffer
    )(x, mask_f, prep["wq_t"], prep["wkv_t"], prep["wc_t"], prep["bc"], prep["cste"])

    # match the PyTorch output shapes: pred (1, B, out_dim), attn (T, B, 1)
    return pred[None, :, :], attn[:, :, None]


# ----------------------------------------------------------------------------
# Pure-JAX reference (for correctness check only)
# ----------------------------------------------------------------------------
def ref_forward(params, x, mask_pad):
    T, B, D = x.shape
    nm = (~mask_pad).astype(jnp.float32)[:, :, None]
    mean_x = (nm * x).sum(0) / nm.sum(0)
    q = mean_x @ params["wq"].T
    k = x @ params["wk"].T
    v = x @ params["wv"].T
    scores = jnp.einsum("bd,tbd->tb", q, k)
    logits = (params["cste"][0] + scores) / math.sqrt(D)
    logits = jnp.where(mask_pad, -jnp.inf, logits)
    attn = jax.nn.softmax(logits, axis=0)
    out = jnp.einsum("tb,tbd->bd", attn, v)
    pred = out @ params["wc"].T + params["bc"]
    return pred[None], attn[:, :, None]


# ----------------------------------------------------------------------------
# Deterministic parameter construction + driver
# ----------------------------------------------------------------------------
def make_params(key, input_dim, out_dim):
    D = input_dim
    scale = 1.0 / math.sqrt(D)
    ks = jax.random.split(key, 6)
    return dict(
        wq=jax.random.uniform(ks[0], (D, D), jnp.float32, -scale, scale),
        wk=jax.random.uniform(ks[1], (D, D), jnp.float32, -scale, scale),
        wv=jax.random.uniform(ks[2], (D, D), jnp.float32, -scale, scale),
        cste=jax.random.normal(ks[3], (1,), jnp.float32),
        wc=jax.random.uniform(ks[4], (out_dim, D), jnp.float32, -scale, scale),
        bc=jax.random.uniform(ks[5], (out_dim,), jnp.float32, -scale, scale),
    )


if __name__ == "__main__":
    T, B, D, OUT_DIM = 8, 2, 32, 5

    key = jax.random.PRNGKey(0)
    k_param, k_x = jax.random.split(key)
    params = make_params(k_param, D, OUT_DIM)
    prep = prepare_params(params)     # one-time packing, hoisted out of forward

    x = jax.random.normal(k_x, (T, B, D), jnp.float32)
    # padding mask: True == padded. Sequence lengths: batch 0 -> 8, batch 1 -> 5.
    lengths = jnp.array([T, 5], jnp.int32)
    mask_pad = jnp.arange(T)[:, None] >= lengths[None, :]   # (T, B) bool

    pred, attn = attention_model_q3(prep, x, mask_pad)
    pred = jax.block_until_ready(pred)
    attn = jax.block_until_ready(attn)

    pred_ref, attn_ref = ref_forward(params, x, mask_pad)
    assert pred.shape == (1, B, OUT_DIM) and attn.shape == (T, B, 1)
    assert jnp.allclose(pred, pred_ref, atol=2e-3, rtol=2e-3), \
        float(jnp.max(jnp.abs(pred - pred_ref)))
    assert jnp.allclose(attn, attn_ref, atol=2e-3, rtol=2e-3), \
        float(jnp.max(jnp.abs(attn - attn_ref)))

    print("KERNEL_OK")
</pallas_src>

<mosaic_0001>
module attributes {stable_mosaic.version = 11 : i64} {
  func.func @_fused_attention_kernel(%arg0: memref<8x2x32xf32, #tpu.memory_space<vmem>>, %arg1: memref<8x2xf32, #tpu.memory_space<vmem>>, %arg2: memref<32x32xf32, #tpu.memory_space<vmem>>, %arg3: memref<32x64xf32, #tpu.memory_space<vmem>>, %arg4: memref<32x5xf32, #tpu.memory_space<vmem>>, %arg5: memref<1x5xf32, #tpu.memory_space<vmem>>, %arg6: memref<1xf32, #tpu.memory_space<smem>>, %arg7: memref<2x5xf32, #tpu.memory_space<vmem>>, %arg8: memref<8x2xf32, #tpu.memory_space<vmem>>, %arg9: memref<8x2x64xf32, #tpu.memory_space<vmem>>) attributes {dimension_semantics = [], scalar_prefetch = 0 : i64, scratch_operands = 1 : i64, tpu.core_type = #tpu.core_type<tc>} {
    %c0 = arith.constant 0 : index
    %c0_0 = arith.constant 0 : index
    %c0_1 = arith.constant 0 : index
    %0 = vector.load %arg0[%c0, %c0_0, %c0_1] : memref<8x2x32xf32, #tpu.memory_space<vmem>>, vector<8x2x32xf32>
    %c0_2 = arith.constant 0 : index
    %c0_3 = arith.constant 0 : index
    %1 = vector.load %arg1[%c0_2, %c0_3] : memref<8x2xf32, #tpu.memory_space<vmem>>, vector<8x2xf32>
    %cst = arith.constant 1.000000e+00 : f32
    %2 = vector.broadcast %cst : f32 to vector<8x2xf32>
    %3 = arith.subf %2, %1 : vector<8x2xf32>
    %4 = vector.shape_cast %3 : vector<8x2xf32> to vector<8x2x1xf32>
    %5 = vector.broadcast %4 : vector<8x2x1xf32> to vector<8x2x32xf32>
    %6 = arith.mulf %5, %0 : vector<8x2x32xf32>
    %cst_4 = arith.constant dense<0.000000e+00> : vector<2x32xf32>
    %7 = vector.multi_reduction <add>, %6, %cst_4 [0] : vector<8x2x32xf32> to vector<2x32xf32>
    %cst_5 = arith.constant dense<0.000000e+00> : vector<2x1xf32>
    %8 = vector.multi_reduction <add>, %4, %cst_5 [0] : vector<8x2x1xf32> to vector<2x1xf32>
    %9 = tpu.reciprocal %8 {approx = true} : vector<2x1xf32> -> vector<2x1xf32>
    %10 = vector.broadcast %9 : vector<2x1xf32> to vector<2x32xf32>
    %11 = arith.mulf %7, %10 : vector<2x32xf32>
    %c0_6 = arith.constant 0 : index
    %c0_7 = arith.constant 0 : index
    %12 = vector.load %arg2[%c0_6, %c0_7] : memref<32x32xf32, #tpu.memory_space<vmem>>, vector<32x32xf32>
    %cst_8 = arith.constant dense<0.000000e+00> : vector<2x32xf32>
    %13 = tpu.matmul %11, %12, %cst_8 {dimension_numbers = #tpu.dot_dimension_numbers<[1], [0], [0], [1], [0, 0, 1, 1], [], []>} : vector<2x32xf32>, vector<32x32xf32>, vector<2x32xf32> -> vector<2x32xf32>
    %c0_9 = arith.constant 0 : index
    %c0_10 = arith.constant 0 : index
    %c0_11 = arith.constant 0 : index
    %14 = vector.load %arg0[%c0_9, %c0_10, %c0_11] : memref<8x2x32xf32, #tpu.memory_space<vmem>>, vector<1x2x32xf32>
    %15 = vector.shape_cast %14 : vector<1x2x32xf32> to vector<2x32xf32>
    %c0_12 = arith.constant 0 : index
    %c0_13 = arith.constant 0 : index
    %16 = vector.load %arg3[%c0_12, %c0_13] : memref<32x64xf32, #tpu.memory_space<vmem>>, vector<32x64xf32>
    %cst_14 = arith.constant dense<0.000000e+00> : vector<2x64xf32>
    %17 = tpu.matmul %15, %16, %cst_14 {dimension_numbers = #tpu.dot_dimension_numbers<[1], [0], [0], [1], [0, 0, 1, 1], [], []>} : vector<2x32xf32>, vector<32x64xf32>, vector<2x64xf32> -> vector<2x64xf32>
    %c0_15 = arith.constant 0 : index
    %c0_16 = arith.constant 0 : index
    %c0_17 = arith.constant 0 : index
    %18 = vector.load %arg9[%c0_15, %c0_16, %c0_17] : memref<8x2x64xf32, #tpu.memory_space<vmem>>, vector<1x2x64xf32>
    %19 = vector.shape_cast %18 : vector<1x2x64xf32> to vector<2x64xf32>
    %20 = vector.shape_cast %17 : vector<2x64xf32> to vector<1x2x64xf32>
    tpu.vector_store %arg9[%c0_15, %c0_16, %c0_17], %20 {strides = array<i32>} : memref<8x2x64xf32, #tpu.memory_space<vmem>>, vector<1x2x64xf32>,
    %c1 = arith.constant 1 : index
    %c0_18 = arith.constant 0 : index
    %c0_19 = arith.constant 0 : index
    %21 = vector.load %arg0[%c1, %c0_18, %c0_19] : memref<8x2x32xf32, #tpu.memory_space<vmem>>, vector<1x2x32xf32>
    %22 = vector.shape_cast %21 : vector<1x2x32xf32> to vector<2x32xf32>
    %c0_20 = arith.constant 0 : index
    %c0_21 = arith.constant 0 : index
    %23 = vector.load %arg3[%c0_20, %c0_21] : memref<32x64xf32, #tpu.memory_space<vmem>>, vector<32x64xf32>
    %cst_22 = arith.constant dense<0.000000e+00> : vector<2x64xf32>
    %24 = tpu.matmul %22, %23, %cst_22 {dimension_numbers = #tpu.dot_dimension_numbers<[1], [0], [0], [1], [0, 0, 1, 1], [], []>} : vector<2x32xf32>, vector<32x64xf32>, vector<2x64xf32> -> vector<2x64xf32>
    %c1_23 = arith.constant 1 : index
    %c0_24 = arith.constant 0 : index
    %c0_25 = arith.constant 0 : index
    %25 = vector.load %arg9[%c1_23, %c0_24, %c0_25] : memref<8x2x64xf32, #tpu.memory_space<vmem>>, vector<1x2x64xf32>
    %26 = vector.shape_cast %25 : vector<1x2x64xf32> to vector<2x64xf32>
    %27 = vector.shape_cast %24 : vector<2x64xf32> to vector<1x2x64xf32>
    tpu.vector_store %arg9[%c1_23, %c0_24, %c0_25], %27 {strides = array<i32>} : memref<8x2x64xf32, #tpu.memory_space<vmem>>, vector<1x2x64xf32>,
    %c2 = arith.constant 2 : index
    %c0_26 = arith.constant 0 : index
    %c0_27 = arith.constant 0 : index
    %28 = vector.load %arg0[%c2, %c0_26, %c0_27] : memref<8x2x32xf32, #tpu.memory_space<vmem>>, vector<1x2x32xf32>
    %29 = vector.shape_cast %28 : vector<1x2x32xf32> to vector<2x32xf32>
    %c0_28 = arith.constant 0 : index
    %c0_29 = arith.constant 0 : index
    %30 = vector.load %arg3[%c0_28, %c0_29] : memref<32x64xf32, #tpu.memory_space<vmem>>, vector<32x64xf32>
    %cst_30 = arith.constant dense<0.000000e+00> : vector<2x64xf32>
    %31 = tpu.matmul %29, %30, %cst_30 {dimension_numbers = #tpu.dot_dimension_numbers<[1], [0], [0], [1], [0, 0, 1, 1], [], []>} : vector<2x32xf32>, vector<32x64xf32>, vector<2x64xf32> -> vector<2x64xf32>
    %c2_31 = arith.constant 2 : index
    %c0_32 = arith.constant 0 : index
    %c0_33 = arith.constant 0 : index
    %32 = vector.load %arg9[%c2_31, %c0_32, %c0_33] : memref<8x2x64xf32, #tpu.memory_space<vmem>>, vector<1x2x64xf32>
    %33 = vector.shape_cast %32 : vector<1x2x64xf32> to vector<2x64xf32>
    %34 = vector.shape_cast %31 : vector<2x64xf32> to vector<1x2x64xf32>
    tpu.vector_store %arg9[%c2_31, %c0_32, %c0_33], %34 {strides = array<i32>} : memref<8x2x64xf32, #tpu.memory_space<vmem>>, vector<1x2x64xf32>,
    %c3 = arith.constant 3 : index
    %c0_34 = arith.constant 0 : index
    %c0_35 = arith.constant 0 : index
    %35 = vector.load %arg0[%c3, %c0_34, %c0_35] : memref<8x2x32xf32, #tpu.memory_space<vmem>>, vector<1x2x32xf32>
    %36 = vector.shape_cast %35 : vector<1x2x32xf32> to vector<2x32xf32>
    %c0_36 = arith.constant 0 : index
    %c0_37 = arith.constant 0 : index
    %37 = vector.load %arg3[%c0_36, %c0_37] : memref<32x64xf32, #tpu.memory_space<vmem>>, vector<32x64xf32>
    %cst_38 = arith.constant dense<0.000000e+00> : vector<2x64xf32>
    %38 = tpu.matmul %36, %37, %cst_38 {dimension_numbers = #tpu.dot_dimension_numbers<[1], [0], [0], [1], [0, 0, 1, 1], [], []>} : vector<2x32xf32>, vector<32x64xf32>, vector<2x64xf32> -> vector<2x64xf32>
    %c3_39 = arith.constant 3 : index
    %c0_40 = arith.constant 0 : index
    %c0_41 = arith.constant 0 : index
    %39 = vector.load %arg9[%c3_39, %c0_40, %c0_41] : memref<8x2x64xf32, #tpu.memory_space<vmem>>, vector<1x2x64xf32>
    %40 = vector.shape_cast %39 : vector<1x2x64xf32> to vector<2x64xf32>
    %41 = vector.shape_cast %38 : vector<2x64xf32> to vector<1x2x64xf32>
    tpu.vector_store %arg9[%c3_39, %c0_40, %c0_41], %41 {strides = array<i32>} : memref<8x2x64xf32, #tpu.memory_space<vmem>>, vector<1x2x64xf32>,
    %c4 = arith.constant 4 : index
    %c0_42 = arith.constant 0 : index
    %c0_43 = arith.constant 0 : index
    %42 = vector.load %arg0[%c4, %c0_42, %c0_43] : memref<8x2x32xf32, #tpu.memory_space<vmem>>, vector<1x2x32xf32>
    %43 = vector.shape_cast %42 : vector<1x2x32xf32> to vector<2x32xf32>
    %c0_44 = arith.constant 0 : index
    %c0_45 = arith.constant 0 : index
    %44 = vector.load %arg3[%c0_44, %c0_45] : memref<32x64xf32, #tpu.memory_space<vmem>>, vector<32x64xf32>
    %cst_46 = arith.constant dense<0.000000e+00> : vector<2x64xf32>
    %45 = tpu.matmul %43, %44, %cst_46 {dimension_numbers = #tpu.dot_dimension_numbers<[1], [0], [0], [1], [0, 0, 1, 1], [], []>} : vector<2x32xf32>, vector<32x64xf32>, vector<2x64xf32> -> vector<2x64xf32>
    %c4_47 = arith.constant 4 : index
    %c0_48 = arith.constant 0 : index
    %c0_49 = arith.constant 0 : index
    %46 = vector.load %arg9[%c4_47, %c0_48, %c0_49] : memref<8x2x64xf32, #tpu.memory_space<vmem>>, vector<1x2x64xf32>
    %47 = vector.shape_cast %46 : vector<1x2x64xf32> to vector<2x64xf32>
    %48 = vector.shape_cast %45 : vector<2x64xf32> to vector<1x2x64xf32>
    tpu.vector_store %arg9[%c4_47, %c0_48, %c0_49], %48 {strides = array<i32>} : memref<8x2x64xf32, #tpu.memory_space<vmem>>, vector<1x2x64xf32>,
    %c5 = arith.constant 5 : index
    %c0_50 = arith.constant 0 : index
    %c0_51 = arith.constant 0 : index
    %49 = vector.load %arg0[%c5, %c0_50, %c0_51] : memref<8x2x32xf32, #tpu.memory_space<vmem>>, vector<1x2x32xf32>
    %50 = vector.shape_cast %49 : vector<1x2x32xf32> to vector<2x32xf32>
    %c0_52 = arith.constant 0 : index
    %c0_53 = arith.constant 0 : index
    %51 = vector.load %arg3[%c0_52, %c0_53] : memref<32x64xf32, #tpu.memory_space<vmem>>, vector<32x64xf32>
    %cst_54 = arith.constant dense<0.000000e+00> : vector<2x64xf32>
    %52 = tpu.matmul %50, %51, %cst_54 {dimension_numbers = #tpu.dot_dimension_numbers<[1], [0], [0], [1], [0, 0, 1, 1], [], []>} : vector<2x32xf32>, vector<32x64xf32>, vector<2x64xf32> -> vector<2x64xf32>
    %c5_55 = arith.constant 5 : index
    %c0_56 = arith.constant 0 : index
    %c0_57 = arith.constant 0 : index
    %53 = vector.load %arg9[%c5_55, %c0_56, %c0_57] : memref<8x2x64xf32, #tpu.memory_space<vmem>>, vector<1x2x64xf32>
    %54 = vector.shape_cast %53 : vector<1x2x64xf32> to vector<2x64xf32>
    %55 = vector.shape_cast %52 : vector<2x64xf32> to vector<1x2x64xf32>
    tpu.vector_store %arg9[%c5_55, %c0_56, %c0_57], %55 {strides = array<i32>} : memref<8x2x64xf32, #tpu.memory_space<vmem>>, vector<1x2x64xf32>,
    %c6 = arith.constant 6 : index
    %c0_58 = arith.constant 0 : index
    %c0_59 = arith.constant 0 : index
    %56 = vector.load %arg0[%c6, %c0_58, %c0_59] : memref<8x2x32xf32, #tpu.memory_space<vmem>>, vector<1x2x32xf32>
    %57 = vector.shape_cast %56 : vector<1x2x32xf32> to vector<2x32xf32>
    %c0_60 = arith.constant 0 : index
    %c0_61 = arith.constant 0 : index
    %58 = vector.load %arg3[%c0_60, %c0_61] : memref<32x64xf32, #tpu.memory_space<vmem>>, vector<32x64xf32>
    %cst_62 = arith.constant dense<0.000000e+00> : vector<2x64xf32>
    %59 = tpu.matmul %57, %58, %cst_62 {dimension_numbers = #tpu.dot_dimension_numbers<[1], [0], [0], [1], [0, 0, 1, 1], [], []>} : vector<2x32xf32>, vector<32x64xf32>, vector<2x64xf32> -> vector<2x64xf32>
    %c6_63 = arith.constant 6 : index
    %c0_64 = arith.constant 0 : index
    %c0_65 = arith.constant 0 : index
    %60 = vector.load %arg9[%c6_63, %c0_64, %c0_65] : memref<8x2x64xf32, #tpu.memory_space<vmem>>, vector<1x2x64xf32>
    %61 = vector.shape_cast %60 : vector<1x2x64xf32> to vector<2x64xf32>
    %62 = vector.shape_cast %59 : vector<2x64xf32> to vector<1x2x64xf32>
    tpu.vector_store %arg9[%c6_63, %c0_64, %c0_65], %62 {strides = array<i32>} : memref<8x2x64xf32, #tpu.memory_space<vmem>>, vector<1x2x64xf32>,
    %c7 = arith.constant 7 : index
    %c0_66 = arith.constant 0 : index
    %c0_67 = arith.constant 0 : index
    %63 = vector.load %arg0[%c7, %c0_66, %c0_67] : memref<8x2x32xf32, #tpu.memory_space<vmem>>, vector<1x2x32xf32>
    %64 = vector.shape_cast %63 : vector<1x2x32xf32> to vector<2x32xf32>
    %c0_68 = arith.constant 0 : index
    %c0_69 = arith.constant 0 : index
    %65 = vector.load %arg3[%c0_68, %c0_69] : memref<32x64xf32, #tpu.memory_space<vmem>>, vector<32x64xf32>
    %cst_70 = arith.constant dense<0.000000e+00> : vector<2x64xf32>
    %66 = tpu.matmul %64, %65, %cst_70 {dimension_numbers = #tpu.dot_dimension_numbers<[1], [0], [0], [1], [0, 0, 1, 1], [], []>} : vector<2x32xf32>, vector<32x64xf32>, vector<2x64xf32> -> vector<2x64xf32>
    %c7_71 = arith.constant 7 : index
    %c0_72 = arith.constant 0 : index
    %c0_73 = arith.constant 0 : index
    %67 = vector.load %arg9[%c7_71, %c0_72, %c0_73] : memref<8x2x64xf32, #tpu.memory_space<vmem>>, vector<1x2x64xf32>
    %68 = vector.shape_cast %67 : vector<1x2x64xf32> to vector<2x64xf32>
    %69 = vector.shape_cast %66 : vector<2x64xf32> to vector<1x2x64xf32>
    tpu.vector_store %arg9[%c7_71, %c0_72, %c0_73], %69 {strides = array<i32>} : memref<8x2x64xf32, #tpu.memory_space<vmem>>, vector<1x2x64xf32>,
    %c0_74 = arith.constant 0 : index
    %c0_75 = arith.constant 0 : index
    %c0_76 = arith.constant 0 : index
    %70 = vector.load %arg9[%c0_74, %c0_75, %c0_76] : memref<8x2x64xf32, #tpu.memory_space<vmem>>, vector<8x2x32xf32>
    %c0_77 = arith.constant 0 : index
    %c0_78 = arith.constant 0 : index
    %c32 = arith.constant 32 : index
    %71 = vector.load %arg9[%c0_77, %c0_78, %c32] : memref<8x2x64xf32, #tpu.memory_space<vmem>>, vector<8x2x32xf32>
    %c0_79 = arith.constant 0 : index
    %72 = memref.load %arg6[%c0_79] : memref<1xf32, #tpu.memory_space<smem>>
    %73 = vector.shape_cast %13 : vector<2x32xf32> to vector<1x2x32xf32>
    %74 = vector.broadcast %73 : vector<1x2x32xf32> to vector<8x2x32xf32>
    %75 = arith.mulf %74, %70 : vector<8x2x32xf32>
    %cst_80 = arith.constant dense<0.000000e+00> : vector<8x2xf32>
    %76 = vector.multi_reduction <add>, %75, %cst_80 [2] : vector<8x2x32xf32> to vector<8x2xf32>
    %77 = vector.broadcast %72 : f32 to vector<8x2xf32>
    %78 = arith.addf %77, %76 : vector<8x2xf32>
    %cst_81 = arith.constant 0.176776692 : f32
    %79 = vector.broadcast %cst_81 : f32 to vector<8x2xf32>
    %80 = arith.mulf %78, %79 : vector<8x2xf32>
    %cst_82 = arith.constant 5.000000e-01 : f32
    %81 = vector.broadcast %cst_82 : f32 to vector<8x2xf32>
    %82 = arith.cmpf ogt, %1, %81 : vector<8x2xf32>
    %cst_83 = arith.constant 0xFF800000 : f32
    %83 = vector.broadcast %cst_83 : f32 to vector<8x2xf32>
    %84 = arith.select %82, %83, %80 : vector<8x2xi1>, vector<8x2xf32>
    %cst_84 = arith.constant dense<0xFF800000> : vector<2xf32>
    %85 = vector.multi_reduction <maximumf>, %84, %cst_84 [0] : vector<8x2xf32> to vector<2xf32>
    %86 = vector.shape_cast %85 : vector<2xf32> to vector<1x2xf32>
    %87 = vector.broadcast %86 : vector<1x2xf32> to vector<8x2xf32>
    %88 = arith.subf %84, %87 : vector<8x2xf32>
    %89 = math.exp %88 : vector<8x2xf32>
    %cst_85 = arith.constant dense<0.000000e+00> : vector<2xf32>
    %90 = vector.multi_reduction <add>, %89, %cst_85 [0] : vector<8x2xf32> to vector<2xf32>
    %91 = vector.shape_cast %90 : vector<2xf32> to vector<1x2xf32>
    %92 = tpu.reciprocal %91 {approx = true} : vector<1x2xf32> -> vector<1x2xf32>
    %93 = vector.broadcast %92 : vector<1x2xf32> to vector<8x2xf32>
    %94 = arith.mulf %89, %93 : vector<8x2xf32>
    %95 = vector.shape_cast %94 : vector<8x2xf32> to vector<8x2x1xf32>
    %96 = vector.broadcast %95 : vector<8x2x1xf32> to vector<8x2x32xf32>
    %97 = arith.mulf %96, %71 : vector<8x2x32xf32>
    %cst_86 = arith.constant dense<0.000000e+00> : vector<2x32xf32>
    %98 = vector.multi_reduction <add>, %97, %cst_86 [0] : vector<8x2x32xf32> to vector<2x32xf32>
    %c0_87 = arith.constant 0 : index
    %c0_88 = arith.constant 0 : index
    %99 = vector.load %arg4[%c0_87, %c0_88] : memref<32x5xf32, #tpu.memory_space<vmem>>, vector<32x5xf32>
    %cst_89 = arith.constant dense<0.000000e+00> : vector<2x5xf32>
    %100 = tpu.matmul %98, %99, %cst_89 {dimension_numbers = #tpu.dot_dimension_numbers<[1], [0], [0], [1], [0, 0, 1, 1], [], []>} : vector<2x32xf32>, vector<32x5xf32>, vector<2x5xf32> -> vector<2x5xf32>
    %c0_90 = arith.constant 0 : index
    %c0_91 = arith.constant 0 : index
    %101 = vector.load %arg5[%c0_90, %c0_91] : memref<1x5xf32, #tpu.memory_space<vmem>>, vector<1x5xf32>
    %102 = vector.broadcast %101 : vector<1x5xf32> to vector<2x5xf32>
    %103 = arith.addf %100, %102 : vector<2x5xf32>
    %c0_92 = arith.constant 0 : index
    %c0_93 = arith.constant 0 : index
    %104 = vector.load %arg7[%c0_92, %c0_93] : memref<2x5xf32, #tpu.memory_space<vmem>>, vector<2x5xf32>
    tpu.vector_store %arg7[%c0_92, %c0_93], %103 {strides = array<i32>} : memref<2x5xf32, #tpu.memory_space<vmem>>, vector<2x5xf32>,
    %c0_94 = arith.constant 0 : index
    %c0_95 = arith.constant 0 : index
    %105 = vector.load %arg8[%c0_94, %c0_95] : memref<8x2xf32, #tpu.memory_space<vmem>>, vector<8x2xf32>
    tpu.vector_store %arg8[%c0_94, %c0_95], %94 {strides = array<i32>} : memref<8x2xf32, #tpu.memory_space<vmem>>, vector<8x2xf32>,
    return
  }
}

</mosaic_0001>

<llo_original>
// kernel: attention_model_q3.1
$region0: #{attention_model_q3.1}
  #allocation0 [shape = 'u32[]', space=smem, size = 0x4, offset = 0x4, fixed_abs, tag = 'smem constant byte address 0x4 - core index']
  #allocation1 [shape = 'u32[144,128]{1,0:T(1,128)}', space=vmem, size = 0x12000, scoped, tag = 'internal scratch']
  #allocation2 [shape = 'f32[8,2,64]{2,1,0:T(2,128)}', space=vmem, size = 0x2000, scoped, tag = 'scratch operand']
  #allocation3 [shape = 'f32[1]{0:T(128)S(6)}', space=smem, size = 0x200, scoped, tag = 'scoped memory for attention_model_q3.1']
  %s0 = inlined_call_operand.hbm [shape: f32[8,2,32], index: 0, kind: input, shape index: {}]
  %s1 = inlined_call_operand.vmem [shape: f32[8,2], index: 1, kind: input, shape index: {}]
  %s2 = inlined_call_operand.vmem [shape: f32[32,32], index: 2, kind: input, shape index: {}]
  %s3 = inlined_call_operand.vmem [shape: f32[32,64], index: 3, kind: input, shape index: {}]
  %s4 = inlined_call_operand.vmem [shape: f32[32,5], index: 4, kind: input, shape index: {}]
  %s5 = inlined_call_operand.vmem [shape: f32[1,5], index: 5, kind: input, shape index: {}]
  %s6 = inlined_call_operand.<no memory space> [shape: f32[1], index: 6, kind: input, shape index: {}]
  %s7 = inlined_call_operand.hbm [shape: f32[2,5], index: 7, kind: output, shape index: {0}]
  %s8 = inlined_call_operand.vmem [shape: f32[8,2], index: 8, kind: output, shape index: {1}]
  %9 = xla_tuple %s7, %s8
  %s10 = sld [smem:[#allocation0]]
  $region50: #{attention_model_q3.1} parent=0
    _
  %s12 = ssub.s32 1, %s10
  %s13 = scalar_select 0, %s12, %s10
  %14 = sst [smem:[#allocation3]] %s6
  $region1: #{attention_model_q3.1} parent=0
    #allocation4 [shape = 'u8[8192]{0}', space=vmem, size = 0x2000, scoped, tag = 'input window, operand 0, single buffered']
    #allocation5 [shape = 's32[1]{0}', space=sflag, size = 0x4, scoped, tag = 'scoped memory for attention_model_q3.1']
    #allocation6 [shape = 's32[1]{0}', space=sflag, size = 0x4, scoped, tag = 'scoped memory for attention_model_q3.1']
    #allocation7 [shape = 'u8[1024]{0}', space=vmem, size = 0x400, scoped, tag = 'output window, operand 0, single buffered']
    %15 = vsyncpa [#allocation5], 0
    %16 = vsyncpa [#allocation6], 0
    // Predicated region
    $region2: #{attention_model_q3.1} parent=1 // pred_check
      _
    $region3: #{attention_model_q3.1} parent=1 // pred_check_branch
      %18 = sbr.rel (0) target = $region5
    $region4: #{attention_model_q3.1} parent=1 // pred_region
      %s20 = ssub.s32 256, 256
      %21 = vsyncadd [#allocation5], %s20
      %s22 = sshll.u32 [#allocation4], 4
      %s23 = int_to_ptr.vmem [resolvable:$true] %s22
      %28 = dma.hbm_to_vmem [thread:$0]  %s0, 256, %s23, [#allocation5], 32, 32, 2
    $region5: #{attention_model_q3.1} parent=1 // pred_fallthru
      _
    // Predicated region
    $region6: #{attention_model_q3.1} parent=1 // pred_check
      _
    $region7: #{attention_model_q3.1} parent=1 // pred_check_branch
      %30 = sbr.rel (0) target = $region9
    $region8: #{attention_model_q3.1} parent=1 // pred_region
      _
    $region9: #{attention_model_q3.1} parent=1 // pred_fallthru
      _
    // Predicated region
    $region10: #{attention_model_q3.1} parent=1 // pred_check
      _
    $region11: #{attention_model_q3.1} parent=1 // pred_check_branch
      %32 = sbr.rel (0) target = $region13
    $region12: #{attention_model_q3.1} parent=1 // pred_region
      _
    $region13: #{attention_model_q3.1} parent=1 // pred_fallthru
      _
    // Predicated region
    $region14: #{attention_model_q3.1} parent=1 // pred_check
      _
    $region15: #{attention_model_q3.1} parent=1 // pred_check_branch
      %34 = sbr.rel (0) target = $region17
    $region16: #{attention_model_q3.1} parent=1 // pred_region
      _
    $region17: #{attention_model_q3.1} parent=1 // pred_fallthru
      _
    // Predicated region
    $region18: #{attention_model_q3.1} parent=1 // pred_check
      _
    $region19: #{attention_model_q3.1} parent=1 // pred_check_branch
      %36 = sbr.rel (0) target = $region21
    $region20: #{attention_model_q3.1} parent=1 // pred_region
      _
    $region21: #{attention_model_q3.1} parent=1 // pred_fallthru
      _
    // Predicated region
    $region22: #{attention_model_q3.1} parent=1 // pred_check
      _
    $region23: #{attention_model_q3.1} parent=1 // pred_check_branch
      %38 = sbr.rel (0) target = $region25
    $region24: #{attention_model_q3.1} parent=1 // pred_region
      _
    $region25: #{attention_model_q3.1} parent=1 // pred_fallthru
      _
    // Predicated region
    $region26: #{attention_model_q3.1} parent=1 // pred_check
      _
    $region27: #{attention_model_q3.1} parent=1 // pred_check_branch
      %40 = sbr.rel (0) target = $region29
    $region28: #{attention_model_q3.1} parent=1 // pred_region
      _
    $region29: #{attention_model_q3.1} parent=1 // pred_fallthru
      _
    // Predicated region
    $region30: #{attention_model_q3.1} parent=1 // pred_check
      _
    $region31: #{attention_model_q3.1} parent=1 // pred_check_branch
      %42 = sbr.rel (0) target = $region33
    $region32: #{attention_model_q3.1} parent=1 // pred_region
      %43 = dma.done [#allocation5], 256
    $region33: #{attention_model_q3.1} parent=1 // pred_fallthru
      _
    %v44 = vld [vmem:[#allocation4] sm:$0x3]
    %v45 = vld [vmem:[#allocation4 + $0x2] sm:$0x3]
    %v46 = vld [vmem:[#allocation4 + $0x4] sm:$0x3]
    %v47 = vld [vmem:[#allocation4 + $0x6] sm:$0x3]
    %v48 = vld [vmem:[#allocation4 + $0x8] sm:$0x3]
    %v49 = vld [vmem:[#allocation4 + $0xa] sm:$0x3]
    %v50 = vld [vmem:[#allocation4 + $0xc] sm:$0x3]
    %v51 = vld [vmem:[#allocation4 + $0xe] sm:$0x3]
    %v52 = vld [vmem:[%s1] sm:$0xff]
    %v53 = vsub.f32 1.0, %v52
    %v54 = vlaneseq
    %v55 = vshrl.u32 %v54, 7
    %v56 = vsub.s32 0, %v55
    %v57 = vrot.slane %v53, %v56
    %59 = vbcast.lane.b32.xlu0 %v57, 256
    %v60 = vpop.permute.xlu0 %59
    %v61 = vlaneseq
    %v62 = vshrl.u32 %v61, 7
    %v63 = vsub.s32 1, %v62
    %v64 = vrot.slane %v53, %v63
    %66 = vbcast.lane.b32.xlu0 %v64, 256
    %v67 = vpop.permute.xlu0 %66
    %v68 = vlaneseq
    %v69 = vshrl.u32 %v68, 7
    %v70 = vsub.s32 2, %v69
    %v71 = vrot.slane %v53, %v70
    %73 = vbcast.lane.b32.xlu0 %v71, 256
    %v74 = vpop.permute.xlu0 %73
    %v75 = vlaneseq
    %v76 = vshrl.u32 %v75, 7
    %v77 = vsub.s32 3, %v76
    %v78 = vrot.slane %v53, %v77
    %80 = vbcast.lane.b32.xlu0 %v78, 256
    %v81 = vpop.permute.xlu0 %80
    %v82 = vlaneseq
    %v83 = vshrl.u32 %v82, 7
    %v84 = vsub.s32 4, %v83
    %v85 = vrot.slane %v53, %v84
    %87 = vbcast.lane.b32.xlu0 %v85, 256
    %v88 = vpop.permute.xlu0 %87
    %v89 = vlaneseq
    %v90 = vshrl.u32 %v89, 7
    %v91 = vsub.s32 5, %v90
    %v92 = vrot.slane %v53, %v91
    %94 = vbcast.lane.b32.xlu0 %v92, 256
    %v95 = vpop.permute.xlu0 %94
    %v96 = vlaneseq
    %v97 = vshrl.u32 %v96, 7
    %v98 = vsub.s32 6, %v97
    %v99 = vrot.slane %v53, %v98
    %101 = vbcast.lane.b32.xlu0 %v99, 256
    %v102 = vpop.permute.xlu0 %101
    %v103 = vlaneseq
    %v104 = vshrl.u32 %v103, 7
    %v105 = vsub.s32 7, %v104
    %v106 = vrot.slane %v53, %v105
    %108 = vbcast.lane.b32.xlu0 %v106, 256
    %v109 = vpop.permute.xlu0 %108
    %v110 = vmul.f32 %v60, %v44
    %v111 = vmul.f32 %v67, %v45
    %v112 = vmul.f32 %v74, %v46
    %v113 = vmul.f32 %v81, %v47
    %v114 = vmul.f32 %v88, %v48
    %v115 = vmul.f32 %v95, %v49
    %v116 = vmul.f32 %v102, %v50
    %v117 = vmul.f32 %v109, %v51
    %vm118 = vcmask 254976
    %v119 = vsel %vm118, %v110, 0.0
    %v120 = vsel %vm118, %v111, 0.0
    %v121 = vadd.f32 %v119, %v120
    %v122 = vsel %vm118, %v112, 0.0
    %v123 = vadd.f32 %v121, %v122
    %v124 = vsel %vm118, %v113, 0.0
    %v125 = vadd.f32 %v123, %v124
    %v126 = vsel %vm118, %v114, 0.0
    %v127 = vadd.f32 %v125, %v126
    %v128 = vsel %vm118, %v115, 0.0
    %v129 = vadd.f32 %v127, %v128
    %v130 = vsel %vm118, %v116, 0.0
    %v131 = vadd.f32 %v129, %v130
    %v132 = vsel %vm118, %v117, 0.0
    %v133 = vadd.f32 %v131, %v132
    %vm134 = vcmask 1041408
    %v135 = vsel %vm134, %v60, 0.0
    %v136 = vsel %vm134, %v67, 0.0
    %v137 = vadd.f32 %v135, %v136
    %v138 = vsel %vm134, %v74, 0.0
    %v139 = vadd.f32 %v137, %v138
    %v140 = vsel %vm134, %v81, 0.0
    %v141 = vadd.f32 %v139, %v140
    %v142 = vsel %vm134, %v88, 0.0
    %v143 = vadd.f32 %v141, %v142
    %v144 = vsel %vm134, %v95, 0.0
    %v145 = vadd.f32 %v143, %v144
    %v146 = vsel %vm134, %v102, 0.0
    %v147 = vadd.f32 %v145, %v146
    %v148 = vsel %vm134, %v109, 0.0
    %v149 = vadd.f32 %v147, %v148
    %v150 = vrcp.pop %v149
    %v151 = vmul.f32 %v133, %v150
    %v152 = vld [vmem:[%s2] sm:$0xff]
    %v153 = vld [vmem:[%s2 + $0x8] sm:$0xff]
    %v154 = vld [vmem:[%s2 + $0x10] sm:$0xff]
    %v155 = vld [vmem:[%s2 + $0x18] sm:$0xff]
    %vm156 = vcmask 261120
    %v158 = vsel %vm156, %v151, 0
    %160 = vmatprep.subr.mxu0 0.0
    %161 = vmatpush1.msra.mxu0 %v152
    %162 = vmatprep.subr.mxu0 0.0
    %163 = vmatpush1.msra.mxu0 %v153
    %164 = vmatprep.subr.mxu0 0.0
    %165 = vmatpush1.msra.mxu0 %v154
    %166 = vmatprep.subr.mxu0 0.0
    %167 = vmatpush1.msra.mxu0 %v155
    %168 = vmatprep.subr.mxu0 0.0
    %169 = vmatpush1.msra.mxu0 0.0
    %170 = vmatprep.subr.mxu0 0.0
    %171 = vmatpush1.msra.mxu0 0.0
    %172 = vmatprep.subr.mxu0 0.0
    %173 = vmatpush1.msra.mxu0 0.0
    %174 = vmatprep.subr.mxu0 0.0
    %175 = vmatpush1.msra.mxu0 0.0
    %176 = vmatprep.subr.mxu0 0.0
    %177 = vmatpush1.msra.mxu0 0.0
    %178 = vmatprep.subr.mxu0 0.0
    %179 = vmatpush1.msra.mxu0 0.0
    %180 = vmatprep.subr.mxu0 0.0
    %181 = vmatpush1.msra.mxu0 0.0
    %182 = vmatprep.subr.mxu0 0.0
    %183 = vmatpush1.msra.mxu0 0.0
    %184 = vmatprep.subr.mxu0 0.0
    %185 = vmatpush1.msra.mxu0 0.0
    %186 = vmatprep.subr.mxu0 0.0
    %187 = vmatpush1.msra.mxu0 0.0
    %188 = vmatprep.subr.mxu0 0.0
    %189 = vmatpush1.msra.mxu0 0.0
    %190 = vmatprep.subr.mxu0 0.0
    %191 = vmatpush1.msra.mxu0 0.0
    %192 = vmatprep.subr.mxu0 0.0
    %193 = vmatpush1.msra.mxu0 0.0
    %194 = vmatprep.subr.mxu0 0.0
    %195 = vmatpush1.msra.mxu0 0.0
    %196 = vmatprep.subr.mxu0 0.0
    %197 = vmatpush1.msra.mxu0 0.0
    %198 = vmatprep.subr.mxu0 0.0
    %199 = vmatpush1.msra.mxu0 0.0
    %200 = vmatprep.subr.mxu0 0.0
    %201 = vmatpush1.msra.mxu0 0.0
    %202 = vmatprep.subr.mxu0 0.0
    %203 = vmatpush1.msra.mxu0 0.0
    %204 = vmatprep.subr.mxu0 0.0
    %205 = vmatpush1.msra.mxu0 0.0
    %206 = vmatprep.subr.mxu0 0.0
    %207 = vmatpush1.msra.mxu0 0.0
    %208 = vmatprep.subr.mxu0 0.0
    %209 = vmatpush1.msra.mxu0 0.0
    %210 = vmatprep.subr.mxu0 0.0
    %211 = vmatpush1.msra.mxu0 0.0
    %212 = vmatprep.subr.mxu0 0.0
    %213 = vmatpush1.msra.mxu0 0.0
    %214 = vmatprep.subr.mxu0 0.0
    %215 = vmatpush1.msra.mxu0 0.0
    %216 = vmatprep.subr.mxu0 0.0
    %217 = vmatpush1.msra.mxu0 0.0
    %218 = vmatprep.subr.mxu0 0.0
    %219 = vmatpush1.msra.mxu0 0.0
    %220 = vmatprep.subr.mxu0 0.0
    %221 = vmatpush1.msra.mxu0 0.0
    %222 = vmatprep.subr.mxu0 0.0
    %223 = vmatpush1.msra.mxu0 0.0
    %224 = vmatprep.mubr.f32.mxu0 0.0
    %225 = vmatmul.mubr.f32.gmra.mrb[0].mxu0 %v158
    %v226 = vpop.f32.mrb[0].mxu0
    %v227 = vadd.f32 0.0, %v226
    %v228 = vpop.f32.mrb[0].mxu0
    %229 = vdwg.mxu0
    %v230 = vld [vmem:[#allocation4] sm:$0x3]
    %v231 = vld [vmem:[%s3] sm:$0xff]
    %v232 = vld [vmem:[%s3 + $0x8] sm:$0xff]
    %v233 = vld [vmem:[%s3 + $0x10] sm:$0xff]
    %v234 = vld [vmem:[%s3 + $0x18] sm:$0xff]
    %v236 = vsel %vm156, %v230, 0
    %238 = vmatprep.subr.mxu0 0.0
    %239 = vmatpush1.msra.mxu0 %v231
    %240 = vmatprep.subr.mxu0 0.0
    %241 = vmatpush1.msra.mxu0 %v232
    %242 = vmatprep.subr.mxu0 0.0
    %243 = vmatpush1.msra.mxu0 %v233
    %244 = vmatprep.subr.mxu0 0.0
    %245 = vmatpush1.msra.mxu0 %v234
    %246 = vmatprep.subr.mxu0 0.0
    %247 = vmatpush1.msra.mxu0 0.0
    %248 = vmatprep.subr.mxu0 0.0
    %249 = vmatpush1.msra.mxu0 0.0
    %250 = vmatprep.subr.mxu0 0.0
    %251 = vmatpush1.msra.mxu0 0.0
    %252 = vmatprep.subr.mxu0 0.0
    %253 = vmatpush1.msra.mxu0 0.0
    %254 = vmatprep.subr.mxu0 0.0
    %255 = vmatpush1.msra.mxu0 0.0
    %256 = vmatprep.subr.mxu0 0.0
    %257 = vmatpush1.msra.mxu0 0.0
    %258 = vmatprep.subr.mxu0 0.0
    %259 = vmatpush1.msra.mxu0 0.0
    %260 = vmatprep.subr.mxu0 0.0
    %261 = vmatpush1.msra.mxu0 0.0
    %262 = vmatprep.subr.mxu0 0.0
    %263 = vmatpush1.msra.mxu0 0.0
    %264 = vmatprep.subr.mxu0 0.0
    %265 = vmatpush1.msra.mxu0 0.0
    %266 = vmatprep.subr.mxu0 0.0
    %267 = vmatpush1.msra.mxu0 0.0
    %268 = vmatprep.subr.mxu0 0.0
    %269 = vmatpush1.msra.mxu0 0.0
    %270 = vmatprep.subr.mxu0 0.0
    %271 = vmatpush1.msra.mxu0 0.0
    %272 = vmatprep.subr.mxu0 0.0
    %273 = vmatpush1.msra.mxu0 0.0
    %274 = vmatprep.subr.mxu0 0.0
    %275 = vmatpush1.msra.mxu0 0.0
    %276 = vmatprep.subr.mxu0 0.0
    %277 = vmatpush1.msra.mxu0 0.0
    %278 = vmatprep.subr.mxu0 0.0
    %279 = vmatpush1.msra.mxu0 0.0
    %280 = vmatprep.subr.mxu0 0.0
    %281 = vmatpush1.msra.mxu0 0.0
    %282 = vmatprep.subr.mxu0 0.0
    %283 = vmatpush1.msra.mxu0 0.0
    %284 = vmatprep.subr.mxu0 0.0
    %285 = vmatpush1.msra.mxu0 0.0
    %286 = vmatprep.subr.mxu0 0.0
    %287 = vmatpush1.msra.mxu0 0.0
    %288 = vmatprep.subr.mxu0 0.0
    %289 = vmatpush1.msra.mxu0 0.0
    %290 = vmatprep.subr.mxu0 0.0
    %291 = vmatpush1.msra.mxu0 0.0
    %292 = vmatprep.subr.mxu0 0.0
    %293 = vmatpush1.msra.mxu0 0.0
    %294 = vmatprep.subr.mxu0 0.0
    %295 = vmatpush1.msra.mxu0 0.0
    %296 = vmatprep.subr.mxu0 0.0
    %297 = vmatpush1.msra.mxu0 0.0
    %298 = vmatprep.subr.mxu0 0.0
    %299 = vmatpush1.msra.mxu0 0.0
    %300 = vmatprep.subr.mxu0 0.0
    %301 = vmatpush1.msra.mxu0 0.0
    %302 = vmatprep.mubr.f32.mxu0 0.0
    %303 = vmatmul.mubr.f32.gmra.mrb[0].mxu0 %v236
    %v304 = vpop.f32.mrb[0].mxu0
    %v305 = vadd.f32 0.0, %v304
    %v306 = vpop.f32.mrb[0].mxu0
    %307 = vdwg.mxu0
    %vm308 = vcmask 517120
    %309 = vst.msk [vmem:[#allocation2] sm:$0x3] %vm308, %v305
    %s310 = scalar_lea.vmem [#allocation4], 2
    %v311 = vld [vmem:[%s310] sm:$0x3]
    %v312 = vld [vmem:[%s3] sm:$0xff]
    %v313 = vld [vmem:[%s3 + $0x8] sm:$0xff]
    %v314 = vld [vmem:[%s3 + $0x10] sm:$0xff]
    %v315 = vld [vmem:[%s3 + $0x18] sm:$0xff]
    %v317 = vsel %vm156, %v311, 0
    %319 = vmatprep.subr.mxu0 0.0
    %320 = vmatpush1.msra.mxu0 %v312
    %321 = vmatprep.subr.mxu0 0.0
    %322 = vmatpush1.msra.mxu0 %v313
    %323 = vmatprep.subr.mxu0 0.0
    %324 = vmatpush1.msra.mxu0 %v314
    %325 = vmatprep.subr.mxu0 0.0
    %326 = vmatpush1.msra.mxu0 %v315
    %327 = vmatprep.subr.mxu0 0.0
    %328 = vmatpush1.msra.mxu0 0.0
    %329 = vmatprep.subr.mxu0 0.0
    %330 = vmatpush1.msra.mxu0 0.0
    %331 = vmatprep.subr.mxu0 0.0
    %332 = vmatpush1.msra.mxu0 0.0
    %333 = vmatprep.subr.mxu0 0.0
    %334 = vmatpush1.msra.mxu0 0.0
    %335 = vmatprep.subr.mxu0 0.0
    %336 = vmatpush1.msra.mxu0 0.0
    %337 = vmatprep.subr.mxu0 0.0
    %338 = vmatpush1.msra.mxu0 0.0
    %339 = vmatprep.subr.mxu0 0.0
    %340 = vmatpush1.msra.mxu0 0.0
    %341 = vmatprep.subr.mxu0 0.0
    %342 = vmatpush1.msra.mxu0 0.0
    %343 = vmatprep.subr.mxu0 0.0
    %344 = vmatpush1.msra.mxu0 0.0
    %345 = vmatprep.subr.mxu0 0.0
    %346 = vmatpush1.msra.mxu0 0.0
    %347 = vmatprep.subr.mxu0 0.0
    %348 = vmatpush1.msra.mxu0 0.0
    %349 = vmatprep.subr.mxu0 0.0
    %350 = vmatpush1.msra.mxu0 0.0
    %351 = vmatprep.subr.mxu0 0.0
    %352 = vmatpush1.msra.mxu0 0.0
    %353 = vmatprep.subr.mxu0 0.0
    %354 = vmatpush1.msra.mxu0 0.0
    %355 = vmatprep.subr.mxu0 0.0
    %356 = vmatpush1.msra.mxu0 0.0
    %357 = vmatprep.subr.mxu0 0.0
    %358 = vmatpush1.msra.mxu0 0.0
    %359 = vmatprep.subr.mxu0 0.0
    %360 = vmatpush1.msra.mxu0 0.0
    %361 = vmatprep.subr.mxu0 0.0
    %362 = vmatpush1.msra.mxu0 0.0
    %363 = vmatprep.subr.mxu0 0.0
    %364 = vmatpush1.msra.mxu0 0.0
    %365 = vmatprep.subr.mxu0 0.0
    %366 = vmatpush1.msra.mxu0 0.0
    %367 = vmatprep.subr.mxu0 0.0
    %368 = vmatpush1.msra.mxu0 0.0
    %369 = vmatprep.subr.mxu0 0.0
    %370 = vmatpush1.msra.mxu0 0.0
    %371 = vmatprep.subr.mxu0 0.0
    %372 = vmatpush1.msra.mxu0 0.0
    %373 = vmatprep.subr.mxu0 0.0
    %374 = vmatpush1.msra.mxu0 0.0
    %375 = vmatprep.subr.mxu0 0.0
    %376 = vmatpush1.msra.mxu0 0.0
    %377 = vmatprep.subr.mxu0 0.0
    %378 = vmatpush1.msra.mxu0 0.0
    %379 = vmatprep.subr.mxu0 0.0
    %380 = vmatpush1.msra.mxu0 0.0
    %381 = vmatprep.subr.mxu0 0.0
    %382 = vmatpush1.msra.mxu0 0.0
    %383 = vmatprep.mubr.f32.mxu0 0.0
    %384 = vmatmul.mubr.f32.gmra.mrb[0].mxu0 %v317
    %v385 = vpop.f32.mrb[0].mxu0
    %v386 = vadd.f32 0.0, %v385
    %v387 = vpop.f32.mrb[0].mxu0
    %388 = vdwg.mxu0
    %s389 = scalar_lea.vmem [#allocation2], 2
    %390 = vst.msk [vmem:[%s389] sm:$0x3] %vm308, %v386
    %s391 = scalar_lea.vmem [#allocation4], 4
    %v392 = vld [vmem:[%s391] sm:$0x3]
    %v393 = vld [vmem:[%s3] sm:$0xff]
    %v394 = vld [vmem:[%s3 + $0x8] sm:$0xff]
    %v395 = vld [vmem:[%s3 + $0x10] sm:$0xff]
    %v396 = vld [vmem:[%s3 + $0x18] sm:$0xff]
    %v398 = vsel %vm156, %v392, 0
    %400 = vmatprep.subr.mxu0 0.0
    %401 = vmatpush1.msra.mxu0 %v393
    %402 = vmatprep.subr.mxu0 0.0
    %403 = vmatpush1.msra.mxu0 %v394
    %404 = vmatprep.subr.mxu0 0.0
    %405 = vmatpush1.msra.mxu0 %v395
    %406 = vmatprep.subr.mxu0 0.0
    %407 = vmatpush1.msra.mxu0 %v396
    %408 = vmatprep.subr.mxu0 0.0
    %409 = vmatpush1.msra.mxu0 0.0
    %410 = vmatprep.subr.mxu0 0.0
    %411 = vmatpush1.msra.mxu0 0.0
    %412 = vmatprep.subr.mxu0 0.0
    %413 = vmatpush1.msra.mxu0 0.0
    %414 = vmatprep.subr.mxu0 0.0
    %415 = vmatpush1.msra.mxu0 0.0
    %416 = vmatprep.subr.mxu0 0.0
    %417 = vmatpush1.msra.mxu0 0.0
    %418 = vmatprep.subr.mxu0 0.0
    %419 = vmatpush1.msra.mxu0 0.0
    %420 = vmatprep.subr.mxu0 0.0
    %421 = vmatpush1.msra.mxu0 0.0
    %422 = vmatprep.subr.mxu0 0.0
    %423 = vmatpush1.msra.mxu0 0.0
    %424 = vmatprep.subr.mxu0 0.0
    %425 = vmatpush1.msra.mxu0 0.0
    %426 = vmatprep.subr.mxu0 0.0
    %427 = vmatpush1.msra.mxu0 0.0
    %428 = vmatprep.subr.mxu0 0.0
    %429 = vmatpush1.msra.mxu0 0.0
    %430 = vmatprep.subr.mxu0 0.0
    %431 = vmatpush1.msra.mxu0 0.0
    %432 = vmatprep.subr.mxu0 0.0
    %433 = vmatpush1.msra.mxu0 0.0
    %434 = vmatprep.subr.mxu0 0.0
    %435 = vmatpush1.msra.mxu0 0.0
    %436 = vmatprep.subr.mxu0 0.0
    %437 = vmatpush1.msra.mxu0 0.0
    %438 = vmatprep.subr.mxu0 0.0
    %439 = vmatpush1.msra.mxu0 0.0
    %440 = vmatprep.subr.mxu0 0.0
    %441 = vmatpush1.msra.mxu0 0.0
    %442 = vmatprep.subr.mxu0 0.0
    %443 = vmatpush1.msra.mxu0 0.0
    %444 = vmatprep.subr.mxu0 0.0
    %445 = vmatpush1.msra.mxu0 0.0
    %446 = vmatprep.subr.mxu0 0.0
    %447 = vmatpush1.msra.mxu0 0.0
    %448 = vmatprep.subr.mxu0 0.0
    %449 = vmatpush1.msra.mxu0 0.0
    %450 = vmatprep.subr.mxu0 0.0
    %451 = vmatpush1.msra.mxu0 0.0
    %452 = vmatprep.subr.mxu0 0.0
    %453 = vmatpush1.msra.mxu0 0.0
    %454 = vmatprep.subr.mxu0 0.0
    %455 = vmatpush1.msra.mxu0 0.0
    %456 = vmatprep.subr.mxu0 0.0
    %457 = vmatpush1.msra.mxu0 0.0
    %458 = vmatprep.subr.mxu0 0.0
    %459 = vmatpush1.msra.mxu0 0.0
    %460 = vmatprep.subr.mxu0 0.0
    %461 = vmatpush1.msra.mxu0 0.0
    %462 = vmatprep.subr.mxu0 0.0
    %463 = vmatpush1.msra.mxu0 0.0
    %464 = vmatprep.mubr.f32.mxu0 0.0
    %465 = vmatmul.mubr.f32.gmra.mrb[0].mxu0 %v398
    %v466 = vpop.f32.mrb[0].mxu0
    %v467 = vadd.f32 0.0, %v466
    %v468 = vpop.f32.mrb[0].mxu0
    %469 = vdwg.mxu0
    %s470 = scalar_lea.vmem [#allocation2], 4
    %471 = vst.msk [vmem:[%s470] sm:$0x3] %vm308, %v467
    %s472 = scalar_lea.vmem [#allocation4], 6
    %v473 = vld [vmem:[%s472] sm:$0x3]
    %v474 = vld [vmem:[%s3] sm:$0xff]
    %v475 = vld [vmem:[%s3 + $0x8] sm:$0xff]
    %v476 = vld [vmem:[%s3 + $0x10] sm:$0xff]
    %v477 = vld [vmem:[%s3 + $0x18] sm:$0xff]
    %v479 = vsel %vm156, %v473, 0
    %481 = vmatprep.subr.mxu0 0.0
    %482 = vmatpush1.msra.mxu0 %v474
    %483 = vmatprep.subr.mxu0 0.0
    %484 = vmatpush1.msra.mxu0 %v475
    %485 = vmatprep.subr.mxu0 0.0
    %486 = vmatpush1.msra.mxu0 %v476
    %487 = vmatprep.subr.mxu0 0.0
    %488 = vmatpush1.msra.mxu0 %v477
    %489 = vmatprep.subr.mxu0 0.0
    %490 = vmatpush1.msra.mxu0 0.0
    %491 = vmatprep.subr.mxu0 0.0
    %492 = vmatpush1.msra.mxu0 0.0
    %493 = vmatprep.subr.mxu0 0.0
    %494 = vmatpush1.msra.mxu0 0.0
    %495 = vmatprep.subr.mxu0 0.0
    %496 = vmatpush1.msra.mxu0 0.0
    %497 = vmatprep.subr.mxu0 0.0
    %498 = vmatpush1.msra.mxu0 0.0
    %499 = vmatprep.subr.mxu0 0.0
    %500 = vmatpush1.msra.mxu0 0.0
    %501 = vmatprep.subr.mxu0 0.0
    %502 = vmatpush1.msra.mxu0 0.0
    %503 = vmatprep.subr.mxu0 0.0
    %504 = vmatpush1.msra.mxu0 0.0
    %505 = vmatprep.subr.mxu0 0.0
    %506 = vmatpush1.msra.mxu0 0.0
    %507 = vmatprep.subr.mxu0 0.0
    %508 = vmatpush1.msra.mxu0 0.0
    %509 = vmatprep.subr.mxu0 0.0
    %510 = vmatpush1.msra.mxu0 0.0
    %511 = vmatprep.subr.mxu0 0.0
    %512 = vmatpush1.msra.mxu0 0.0
    %513 = vmatprep.subr.mxu0 0.0
    %514 = vmatpush1.msra.mxu0 0.0
    %515 = vmatprep.subr.mxu0 0.0
    %516 = vmatpush1.msra.mxu0 0.0
    %517 = vmatprep.subr.mxu0 0.0
    %518 = vmatpush1.msra.mxu0 0.0
    %519 = vmatprep.subr.mxu0 0.0
    %520 = vmatpush1.msra.mxu0 0.0
    %521 = vmatprep.subr.mxu0 0.0
    %522 = vmatpush1.msra.mxu0 0.0
    %523 = vmatprep.subr.mxu0 0.0
    %524 = vmatpush1.msra.mxu0 0.0
    %525 = vmatprep.subr.mxu0 0.0
    %526 = vmatpush1.msra.mxu0 0.0
    %527 = vmatprep.subr.mxu0 0.0
    %528 = vmatpush1.msra.mxu0 0.0
    %529 = vmatprep.subr.mxu0 0.0
    %530 = vmatpush1.msra.mxu0 0.0
    %531 = vmatprep.subr.mxu0 0.0
    %532 = vmatpush1.msra.mxu0 0.0
    %533 = vmatprep.subr.mxu0 0.0
    %534 = vmatpush1.msra.mxu0 0.0
    %535 = vmatprep.subr.mxu0 0.0
    %536 = vmatpush1.msra.mxu0 0.0
    %537 = vmatprep.subr.mxu0 0.0
    %538 = vmatpush1.msra.mxu0 0.0
    %539 = vmatprep.subr.mxu0 0.0
    %540 = vmatpush1.msra.mxu0 0.0
    %541 = vmatprep.subr.mxu0 0.0
    %542 = vmatpush1.msra.mxu0 0.0
    %543 = vmatprep.subr.mxu0 0.0
    %544 = vmatpush1.msra.mxu0 0.0
    %545 = vmatprep.mubr.f32.mxu0 0.0
    %546 = vmatmul.mubr.f32.gmra.mrb[0].mxu0 %v479
    %v547 = vpop.f32.mrb[0].mxu0
    %v548 = vadd.f32 0.0, %v547
    %v549 = vpop.f32.mrb[0].mxu0
    %550 = vdwg.mxu0
    %s551 = scalar_lea.vmem [#allocation2], 6
    %552 = vst.msk [vmem:[%s551] sm:$0x3] %vm308, %v548
    %s553 = scalar_lea.vmem [#allocation4], 8
    %v554 = vld [vmem:[%s553] sm:$0x3]
    %v555 = vld [vmem:[%s3] sm:$0xff]
    %v556 = vld [vmem:[%s3 + $0x8] sm:$0xff]
    %v557 = vld [vmem:[%s3 + $0x10] sm:$0xff]
    %v558 = vld [vmem:[%s3 + $0x18] sm:$0xff]
    %v560 = vsel %vm156, %v554, 0
    %562 = vmatprep.subr.mxu0 0.0
    %563 = vmatpush1.msra.mxu0 %v555
    %564 = vmatprep.subr.mxu0 0.0
    %565 = vmatpush1.msra.mxu0 %v556
    %566 = vmatprep.subr.mxu0 0.0
    %567 = vmatpush1.msra.mxu0 %v557
    %568 = vmatprep.subr.mxu0 0.0
    %569 = vmatpush1.msra.mxu0 %v558
    %570 = vmatprep.subr.mxu0 0.0
    %571 = vmatpush1.msra.mxu0 0.0
    %572 = vmatprep.subr.mxu0 0.0
    %573 = vmatpush1.msra.mxu0 0.0
    %574 = vmatprep.subr.mxu0 0.0
    %575 = vmatpush1.msra.mxu0 0.0
    %576 = vmatprep.subr.mxu0 0.0
    %577 = vmatpush1.msra.mxu0 0.0
    %578 = vmatprep.subr.mxu0 0.0
    %579 = vmatpush1.msra.mxu0 0.0
    %580 = vmatprep.subr.mxu0 0.0
    %581 = vmatpush1.msra.mxu0 0.0
    %582 = vmatprep.subr.mxu0 0.0
    %583 = vmatpush1.msra.mxu0 0.0
    %584 = vmatprep.subr.mxu0 0.0
    %585 = vmatpush1.msra.mxu0 0.0
    %586 = vmatprep.subr.mxu0 0.0
    %587 = vmatpush1.msra.mxu0 0.0
    %588 = vmatprep.subr.mxu0 0.0
    %589 = vmatpush1.msra.mxu0 0.0
    %590 = vmatprep.subr.mxu0 0.0
    %591 = vmatpush1.msra.mxu0 0.0
    %592 = vmatprep.subr.mxu0 0.0
    %593 = vmatpush1.msra.mxu0 0.0
    %594 = vmatprep.subr.mxu0 0.0
    %595 = vmatpush1.msra.mxu0 0.0
    %596 = vmatprep.subr.mxu0 0.0
    %597 = vmatpush1.msra.mxu0 0.0
    %598 = vmatprep.subr.mxu0 0.0
    %599 = vmatpush1.msra.mxu0 0.0
    %600 = vmatprep.subr.mxu0 0.0
    %601 = vmatpush1.msra.mxu0 0.0
    %602 = vmatprep.subr.mxu0 0.0
    %603 = vmatpush1.msra.mxu0 0.0
    %604 = vmatprep.subr.mxu0 0.0
    %605 = vmatpush1.msra.mxu0 0.0
    %606 = vmatprep.subr.mxu0 0.0
    %607 = vmatpush1.msra.mxu0 0.0
    %608 = vmatprep.subr.mxu0 0.0
    %609 = vmatpush1.msra.mxu0 0.0
    %610 = vmatprep.subr.mxu0 0.0
    %611 = vmatpush1.msra.mxu0 0.0
    %612 = vmatprep.subr.mxu0 0.0
    %613 = vmatpush1.msra.mxu0 0.0
    %614 = vmatprep.subr.mxu0 0.0
    %615 = vmatpush1.msra.mxu0 0.0
    %616 = vmatprep.subr.mxu0 0.0
    %617 = vmatpush1.msra.mxu0 0.0
    %618 = vmatprep.subr.mxu0 0.0
    %619 = vmatpush1.msra.mxu0 0.0
    %620 = vmatprep.subr.mxu0 0.0
    %621 = vmatpush1.msra.mxu0 0.0
    %622 = vmatprep.subr.mxu0 0.0
    %623 = vmatpush1.msra.mxu0 0.0
    %624 = vmatprep.subr.mxu0 0.0
    %625 = vmatpush1.msra.mxu0 0.0
    %626 = vmatprep.mubr.f32.mxu0 0.0
    %627 = vmatmul.mubr.f32.gmra.mrb[0].mxu0 %v560
    %v628 = vpop.f32.mrb[0].mxu0
    %v629 = vadd.f32 0.0, %v628
    %v630 = vpop.f32.mrb[0].mxu0
    %631 = vdwg.mxu0
    %s632 = scalar_lea.vmem [#allocation2], 8
    %633 = vst.msk [vmem:[%s632] sm:$0x3] %vm308, %v629
    %s634 = scalar_lea.vmem [#allocation4], 10
    %v635 = vld [vmem:[%s634] sm:$0x3]
    %v636 = vld [vmem:[%s3] sm:$0xff]
    %v637 = vld [vmem:[%s3 + $0x8] sm:$0xff]
    %v638 = vld [vmem:[%s3 + $0x10] sm:$0xff]
    %v639 = vld [vmem:[%s3 + $0x18] sm:$0xff]
    %v641 = vsel %vm156, %v635, 0
    %643 = vmatprep.subr.mxu0 0.0
    %644 = vmatpush1.msra.mxu0 %v636
    %645 = vmatprep.subr.mxu0 0.0
    %646 = vmatpush1.msra.mxu0 %v637
    %647 = vmatprep.subr.mxu0 0.0
    %648 = vmatpush1.msra.mxu0 %v638
    %649 = vmatprep.subr.mxu0 0.0
    %650 = vmatpush1.msra.mxu0 %v639
    %651 = vmatprep.subr.mxu0 0.0
    %652 = vmatpush1.msra.mxu0 0.0
    %653 = vmatprep.subr.mxu0 0.0
    %654 = vmatpush1.msra.mxu0 0.0
    %655 = vmatprep.subr.mxu0 0.0
    %656 = vmatpush1.msra.mxu0 0.0
    %657 = vmatprep.subr.mxu0 0.0
    %658 = vmatpush1.msra.mxu0 0.0
    %659 = vmatprep.subr.mxu0 0.0
    %660 = vmatpush1.msra.mxu0 0.0
    %661 = vmatprep.subr.mxu0 0.0
    %662 = vmatpush1.msra.mxu0 0.0
    %663 = vmatprep.subr.mxu0 0.0
    %664 = vmatpush1.msra.mxu0 0.0
    %665 = vmatprep.subr.mxu0 0.0
    %666 = vmatpush1.msra.mxu0 0.0
    %667 = vmatprep.subr.mxu0 0.0
    %668 = vmatpush1.msra.mxu0 0.0
    %669 = vmatprep.subr.mxu0 0.0
    %670 = vmatpush1.msra.mxu0 0.0
    %671 = vmatprep.subr.mxu0 0.0
    %672 = vmatpush1.msra.mxu0 0.0
    %673 = vmatprep.subr.mxu0 0.0
    %674 = vmatpush1.msra.mxu0 0.0
    %675 = vmatprep.subr.mxu0 0.0
    %676 = vmatpush1.msra.mxu0 0.0
    %677 = vmatprep.subr.mxu0 0.0
    %678 = vmatpush1.msra.mxu0 0.0
    %679 = vmatprep.subr.mxu0 0.0
    %680 = vmatpush1.msra.mxu0 0.0
    %681 = vmatprep.subr.mxu0 0.0
    %682 = vmatpush1.msra.mxu0 0.0
    %683 = vmatprep.subr.mxu0 0.0
    %684 = vmatpush1.msra.mxu0 0.0
    %685 = vmatprep.subr.mxu0 0.0
    %686 = vmatpush1.msra.mxu0 0.0
    %687 = vmatprep.subr.mxu0 0.0
    %688 = vmatpush1.msra.mxu0 0.0
    %689 = vmatprep.subr.mxu0 0.0
    %690 = vmatpush1.msra.mxu0 0.0
    %691 = vmatprep.subr.mxu0 0.0
    %692 = vmatpush1.msra.mxu0 0.0
    %693 = vmatprep.subr.mxu0 0.0
    %694 = vmatpush1.msra.mxu0 0.0
    %695 = vmatprep.subr.mxu0 0.0
    %696 = vmatpush1.msra.mxu0 0.0
    %697 = vmatprep.subr.mxu0 0.0
    %698 = vmatpush1.msra.mxu0 0.0
    %699 = vmatprep.subr.mxu0 0.0
    %700 = vmatpush1.msra.mxu0 0.0
    %701 = vmatprep.subr.mxu0 0.0
    %702 = vmatpush1.msra.mxu0 0.0
    %703 = vmatprep.subr.mxu0 0.0
    %704 = vmatpush1.msra.mxu0 0.0
    %705 = vmatprep.subr.mxu0 0.0
    %706 = vmatpush1.msra.mxu0 0.0
    %707 = vmatprep.mubr.f32.mxu0 0.0
    %708 = vmatmul.mubr.f32.gmra.mrb[0].mxu0 %v641
    %v709 = vpop.f32.mrb[0].mxu0
    %v710 = vadd.f32 0.0, %v709
    %v711 = vpop.f32.mrb[0].mxu0
    %712 = vdwg.mxu0
    %s713 = scalar_lea.vmem [#allocation2], 10
    %714 = vst.msk [vmem:[%s713] sm:$0x3] %vm308, %v710
    %s715 = scalar_lea.vmem [#allocation4], 12
    %v716 = vld [vmem:[%s715] sm:$0x3]
    %v717 = vld [vmem:[%s3] sm:$0xff]
    %v718 = vld [vmem:[%s3 + $0x8] sm:$0xff]
    %v719 = vld [vmem:[%s3 + $0x10] sm:$0xff]
    %v720 = vld [vmem:[%s3 + $0x18] sm:$0xff]
    %v722 = vsel %vm156, %v716, 0
    %724 = vmatprep.subr.mxu0 0.0
    %725 = vmatpush1.msra.mxu0 %v717
    %726 = vmatprep.subr.mxu0 0.0
    %727 = vmatpush1.msra.mxu0 %v718
    %728 = vmatprep.subr.mxu0 0.0
    %729 = vmatpush1.msra.mxu0 %v719
    %730 = vmatprep.subr.mxu0 0.0
    %731 = vmatpush1.msra.mxu0 %v720
    %732 = vmatprep.subr.mxu0 0.0
    %733 = vmatpush1.msra.mxu0 0.0
    %734 = vmatprep.subr.mxu0 0.0
    %735 = vmatpush1.msra.mxu0 0.0
    %736 = vmatprep.subr.mxu0 0.0
    %737 = vmatpush1.msra.mxu0 0.0
    %738 = vmatprep.subr.mxu0 0.0
    %739 = vmatpush1.msra.mxu0 0.0
    %740 = vmatprep.subr.mxu0 0.0
    %741 = vmatpush1.msra.mxu0 0.0
    %742 = vmatprep.subr.mxu0 0.0
    %743 = vmatpush1.msra.mxu0 0.0
    %744 = vmatprep.subr.mxu0 0.0
    %745 = vmatpush1.msra.mxu0 0.0
    %746 = vmatprep.subr.mxu0 0.0
    %747 = vmatpush1.msra.mxu0 0.0
    %748 = vmatprep.subr.mxu0 0.0
    %749 = vmatpush1.msra.mxu0 0.0
    %750 = vmatprep.subr.mxu0 0.0
    %751 = vmatpush1.msra.mxu0 0.0
    %752 = vmatprep.subr.mxu0 0.0
    %753 = vmatpush1.msra.mxu0 0.0
    %754 = vmatprep.subr.mxu0 0.0
    %755 = vmatpush1.msra.mxu0 0.0
    %756 = vmatprep.subr.mxu0 0.0
    %757 = vmatpush1.msra.mxu0 0.0
    %758 = vmatprep.subr.mxu0 0.0
    %759 = vmatpush1.msra.mxu0 0.0
    %760 = vmatprep.subr.mxu0 0.0
    %761 = vmatpush1.msra.mxu0 0.0
    %762 = vmatprep.subr.mxu0 0.0
    %763 = vmatpush1.msra.mxu0 0.0
    %764 = vmatprep.subr.mxu0 0.0
    %765 = vmatpush1.msra.mxu0 0.0
    %766 = vmatprep.subr.mxu0 0.0
    %767 = vmatpush1.msra.mxu0 0.0
    %768 = vmatprep.subr.mxu0 0.0
    %769 = vmatpush1.msra.mxu0 0.0
    %770 = vmatprep.subr.mxu0 0.0
    %771 = vmatpush1.msra.mxu0 0.0
    %772 = vmatprep.subr.mxu0 0.0
    %773 = vmatpush1.msra.mxu0 0.0
    %774 = vmatprep.subr.mxu0 0.0
    %775 = vmatpush1.msra.mxu0 0.0
    %776 = vmatprep.subr.mxu0 0.0
    %777 = vmatpush1.msra.mxu0 0.0
    %778 = vmatprep.subr.mxu0 0.0
    %779 = vmatpush1.msra.mxu0 0.0
    %780 = vmatprep.subr.mxu0 0.0
    %781 = vmatpush1.msra.mxu0 0.0
    %782 = vmatprep.subr.mxu0 0.0
    %783 = vmatpush1.msra.mxu0 0.0
    %784 = vmatprep.subr.mxu0 0.0
    %785 = vmatpush1.msra.mxu0 0.0
    %786 = vmatprep.subr.mxu0 0.0
    %787 = vmatpush1.msra.mxu0 0.0
    %788 = vmatprep.mubr.f32.mxu0 0.0
    %789 = vmatmul.mubr.f32.gmra.mrb[0].mxu0 %v722
    %v790 = vpop.f32.mrb[0].mxu0
    %v791 = vadd.f32 0.0, %v790
    %v792 = vpop.f32.mrb[0].mxu0
    %793 = vdwg.mxu0
    %s794 = scalar_lea.vmem [#allocation2], 12
    %795 = vst.msk [vmem:[%s794] sm:$0x3] %vm308, %v791
    %s796 = scalar_lea.vmem [#allocation4], 14
    %v797 = vld [vmem:[%s796] sm:$0x3]
    %v798 = vld [vmem:[%s3] sm:$0xff]
    %v799 = vld [vmem:[%s3 + $0x8] sm:$0xff]
    %v800 = vld [vmem:[%s3 + $0x10] sm:$0xff]
    %v801 = vld [vmem:[%s3 + $0x18] sm:$0xff]
    %v803 = vsel %vm156, %v797, 0
    %805 = vmatprep.subr.mxu0 0.0
    %806 = vmatpush1.msra.mxu0 %v798
    %807 = vmatprep.subr.mxu0 0.0
    %808 = vmatpush1.msra.mxu0 %v799
    %809 = vmatprep.subr.mxu0 0.0
    %810 = vmatpush1.msra.mxu0 %v800
    %811 = vmatprep.subr.mxu0 0.0
    %812 = vmatpush1.msra.mxu0 %v801
    %813 = vmatprep.subr.mxu0 0.0
    %814 = vmatpush1.msra.mxu0 0.0
    %815 = vmatprep.subr.mxu0 0.0
    %816 = vmatpush1.msra.mxu0 0.0
    %817 = vmatprep.subr.mxu0 0.0
    %818 = vmatpush1.msra.mxu0 0.0
    %819 = vmatprep.subr.mxu0 0.0
    %820 = vmatpush1.msra.mxu0 0.0
    %821 = vmatprep.subr.mxu0 0.0
    %822 = vmatpush1.msra.mxu0 0.0
    %823 = vmatprep.subr.mxu0 0.0
    %824 = vmatpush1.msra.mxu0 0.0
    %825 = vmatprep.subr.mxu0 0.0
    %826 = vmatpush1.msra.mxu0 0.0
    %827 = vmatprep.subr.mxu0 0.0
    %828 = vmatpush1.msra.mxu0 0.0
    %829 = vmatprep.subr.mxu0 0.0
    %830 = vmatpush1.msra.mxu0 0.0
    %831 = vmatprep.subr.mxu0 0.0
    %832 = vmatpush1.msra.mxu0 0.0
    %833 = vmatprep.subr.mxu0 0.0
    %834 = vmatpush1.msra.mxu0 0.0
    %835 = vmatprep.subr.mxu0 0.0
    %836 = vmatpush1.msra.mxu0 0.0
    %837 = vmatprep.subr.mxu0 0.0
    %838 = vmatpush1.msra.mxu0 0.0
    %839 = vmatprep.subr.mxu0 0.0
    %840 = vmatpush1.msra.mxu0 0.0
    %841 = vmatprep.subr.mxu0 0.0
    %842 = vmatpush1.msra.mxu0 0.0
    %843 = vmatprep.subr.mxu0 0.0
    %844 = vmatpush1.msra.mxu0 0.0
    %845 = vmatprep.subr.mxu0 0.0
    %846 = vmatpush1.msra.mxu0 0.0
    %847 = vmatprep.subr.mxu0 0.0
    %848 = vmatpush1.msra.mxu0 0.0
    %849 = vmatprep.subr.mxu0 0.0
    %850 = vmatpush1.msra.mxu0 0.0
    %851 = vmatprep.subr.mxu0 0.0
    %852 = vmatpush1.msra.mxu0 0.0
    %853 = vmatprep.subr.mxu0 0.0
    %854 = vmatpush1.msra.mxu0 0.0
    %855 = vmatprep.subr.mxu0 0.0
    %856 = vmatpush1.msra.mxu0 0.0
    %857 = vmatprep.subr.mxu0 0.0
    %858 = vmatpush1.msra.mxu0 0.0
    %859 = vmatprep.subr.mxu0 0.0
    %860 = vmatpush1.msra.mxu0 0.0
    %861 = vmatprep.subr.mxu0 0.0
    %862 = vmatpush1.msra.mxu0 0.0
    %863 = vmatprep.subr.mxu0 0.0
    %864 = vmatpush1.msra.mxu0 0.0
    %865 = vmatprep.subr.mxu0 0.0
    %866 = vmatpush1.msra.mxu0 0.0
    %867 = vmatprep.subr.mxu0 0.0
    %868 = vmatpush1.msra.mxu0 0.0
    %869 = vmatprep.mubr.f32.mxu0 0.0
    %870 = vmatmul.mubr.f32.gmra.mrb[0].mxu0 %v803
    %v871 = vpop.f32.mrb[0].mxu0
    %v872 = vadd.f32 0.0, %v871
    %v873 = vpop.f32.mrb[0].mxu0
    %874 = vdwg.mxu0
    %s875 = scalar_lea.vmem [#allocation2], 14
    %876 = vst.msk [vmem:[%s875] sm:$0x3] %vm308, %v872
    %v877 = vld [vmem:[#allocation2] sm:$0x3]
    %v878 = vld [vmem:[#allocation2 + $0x2] sm:$0x3]
    %v879 = vld [vmem:[#allocation2 + $0x4] sm:$0x3]
    %v880 = vld [vmem:[#allocation2 + $0x6] sm:$0x3]
    %v881 = vld [vmem:[#allocation2 + $0x8] sm:$0x3]
    %v882 = vld [vmem:[#allocation2 + $0xa] sm:$0x3]
    %v883 = vld [vmem:[#allocation2 + $0xc] sm:$0x3]
    %v884 = vld [vmem:[#allocation2 + $0xe] sm:$0x3]
    %s885 = sld [smem:[#allocation3]]
    %v886 = vmul.f32 %v227, %v877
    %v887 = vmul.f32 %v227, %v878
    %v888 = vmul.f32 %v227, %v879
    %v889 = vmul.f32 %v227, %v880
    %v890 = vmul.f32 %v227, %v881
    %v891 = vmul.f32 %v227, %v882
    %v892 = vmul.f32 %v227, %v883
    %v893 = vmul.f32 %v227, %v884
    %v894 = vsel %vm118, %v886, 0.0
    %895 = vadd.xlane.f32.xlu0 %v894
    %v896 = vpop.xlane.xlu0 %895
    %v897 = vsel %vm118, %v887, 0.0
    %898 = vadd.xlane.f32.xlu0 %v897
    %v899 = vpop.xlane.xlu0 %898
    %v900 = vsel %vm118, %v888, 0.0
    %901 = vadd.xlane.f32.xlu0 %v900
    %v902 = vpop.xlane.xlu0 %901
    %v903 = vsel %vm118, %v889, 0.0
    %904 = vadd.xlane.f32.xlu0 %v903
    %v905 = vpop.xlane.xlu0 %904
    %v906 = vsel %vm118, %v890, 0.0
    %907 = vadd.xlane.f32.xlu0 %v906
    %v908 = vpop.xlane.xlu0 %907
    %v909 = vsel %vm118, %v891, 0.0
    %910 = vadd.xlane.f32.xlu0 %v909
    %v911 = vpop.xlane.xlu0 %910
    %v912 = vsel %vm118, %v892, 0.0
    %913 = vadd.xlane.f32.xlu0 %v912
    %v914 = vpop.xlane.xlu0 %913
    %v915 = vsel %vm118, %v893, 0.0
    %916 = vadd.xlane.f32.xlu0 %v915
    %v917 = vpop.xlane.xlu0 %916
    %v918 = vstv %s885
    %v919 = vadd.f32 %v918, %v896
    %v920 = vadd.f32 %v918, %v899
    %v921 = vadd.f32 %v918, %v902
    %v922 = vadd.f32 %v918, %v905
    %v923 = vadd.f32 %v918, %v908
    %v924 = vadd.f32 %v918, %v911
    %v925 = vadd.f32 %v918, %v914
    %v926 = vadd.f32 %v918, %v917
    %v927 = vmul.f32 %v919, 0.17677669
    %v928 = vmul.f32 %v920, 0.17677669
    %v929 = vmul.f32 %v921, 0.17677669
    %v930 = vmul.f32 %v922, 0.17677669
    %v931 = vmul.f32 %v923, 0.17677669
    %v932 = vmul.f32 %v924, 0.17677669
    %v933 = vmul.f32 %v925, 0.17677669
    %v934 = vmul.f32 %v926, 0.17677669
    %vm935 = vcmp.gt.f32.partialorder %v52, 0.5
    %v944 = vlaneseq
    %v945 = vand.u32 %v944, 127
    %v946 = vlaneseq
    %v947 = vshrl.u32 %v946, 7
    %v948 = vsub.s32 %v945, %v947
    %v949 = vrot.slane %v927, %v948
    %v950 = vlaneseq
    %v951 = vshrl.u32 %v950, 7
    %v952 = vsub.s32 %v945, %v951
    %v953 = vrot.slane %v928, %v952
    %v954 = vlaneseq
    %v955 = vshrl.u32 %v954, 7
    %v956 = vsub.s32 %v945, %v955
    %v957 = vrot.slane %v929, %v956
    %v958 = vlaneseq
    %v959 = vshrl.u32 %v958, 7
    %v960 = vsub.s32 %v945, %v959
    %v961 = vrot.slane %v930, %v960
    %v962 = vlaneseq
    %v963 = vshrl.u32 %v962, 7
    %v964 = vsub.s32 %v945, %v963
    %v965 = vrot.slane %v931, %v964
    %v966 = vlaneseq
    %v967 = vshrl.u32 %v966, 7
    %v968 = vsub.s32 %v945, %v967
    %v969 = vrot.slane %v932, %v968
    %v970 = vlaneseq
    %v971 = vshrl.u32 %v970, 7
    %v972 = vsub.s32 %v945, %v971
    %v973 = vrot.slane %v933, %v972
    %v974 = vlaneseq
    %v975 = vshrl.u32 %v974, 7
    %v976 = vsub.s32 %v945, %v975
    %v977 = vrot.slane %v934, %v976
    %vm978 = vcmask 1041409
    %v979 = vsel %vm978, %v953, %v949
    %vm980 = vcmask 1042434
    %v981 = vsel %vm980, %v957, %v979
    %vm982 = vcmask 1043459
    %v983 = vsel %vm982, %v961, %v981
    %vm984 = vcmask 1044484
    %v985 = vsel %vm984, %v965, %v983
    %vm986 = vcmask 1045509
    %v987 = vsel %vm986, %v969, %v985
    %vm988 = vcmask 1046534
    %v989 = vsel %vm988, %v973, %v987
    %vm990 = vcmask 1047559
    %v991 = vsel %vm990, %v977, %v989
    %v993 = vsel %vm935, -inf, %v991
    %vm994 = vcmask 15360
    %v995 = vsel %vm994, %v993, -inf
    %v996 = vrot.slane %v995, 4
    %v997 = vmax.f32 %v995, %v996
    %v998 = vrot.slane %v997, 2
    %v999 = vmax.f32 %v997, %v998
    %v1000 = vrot.slane %v999, 1
    %v1001 = vmax.f32 %v999, %v1000
    %v1002 = vsub.f32 %v993, %v1001
    %v1003 = vmul.f32 %v1002, 1.442695
    %v1004 = vpow.pop %v1003
    %v1005 = vsel %vm994, %v1004, 0.0
    %v1006 = vrot.slane %v1005, 4
    %v1007 = vadd.f32 %v1005, %v1006
    %v1008 = vrot.slane %v1007, 2
    %v1009 = vadd.f32 %v1007, %v1008
    %v1010 = vrot.slane %v1009, 1
    %v1011 = vadd.f32 %v1009, %v1010
    %v1012 = vrcp.pop %v1011
    %v1013 = vmul.f32 %v1004, %v1012
    %v1014 = vlaneseq
    %v1015 = vshrl.u32 %v1014, 7
    %v1016 = vsub.s32 0, %v1015
    %v1017 = vrot.slane %v1013, %v1016
    %1019 = vbcast.lane.b32.xlu0 %v1017, 256
    %v1020 = vpop.permute.xlu0 %1019
    %v1021 = vlaneseq
    %v1022 = vshrl.u32 %v1021, 7
    %v1023 = vsub.s32 1, %v1022
    %v1024 = vrot.slane %v1013, %v1023
    %1026 = vbcast.lane.b32.xlu0 %v1024, 256
    %v1027 = vpop.permute.xlu0 %1026
    %v1028 = vlaneseq
    %v1029 = vshrl.u32 %v1028, 7
    %v1030 = vsub.s32 2, %v1029
    %v1031 = vrot.slane %v1013, %v1030
    %1033 = vbcast.lane.b32.xlu0 %v1031, 256
    %v1034 = vpop.permute.xlu0 %1033
    %v1035 = vlaneseq
    %v1036 = vshrl.u32 %v1035, 7
    %v1037 = vsub.s32 3, %v1036
    %v1038 = vrot.slane %v1013, %v1037
    %1040 = vbcast.lane.b32.xlu0 %v1038, 256
    %v1041 = vpop.permute.xlu0 %1040
    %v1042 = vlaneseq
    %v1043 = vshrl.u32 %v1042, 7
    %v1044 = vsub.s32 4, %v1043
    %v1045 = vrot.slane %v1013, %v1044
    %1047 = vbcast.lane.b32.xlu0 %v1045, 256
    %v1048 = vpop.permute.xlu0 %1047
    %v1049 = vlaneseq
    %v1050 = vshrl.u32 %v1049, 7
    %v1051 = vsub.s32 5, %v1050
    %v1052 = vrot.slane %v1013, %v1051
    %1054 = vbcast.lane.b32.xlu0 %v1052, 256
    %v1055 = vpop.permute.xlu0 %1054
    %v1056 = vlaneseq
    %v1057 = vshrl.u32 %v1056, 7
    %v1058 = vsub.s32 6, %v1057
    %v1059 = vrot.slane %v1013, %v1058
    %1061 = vbcast.lane.b32.xlu0 %v1059, 256
    %v1062 = vpop.permute.xlu0 %1061
    %v1063 = vlaneseq
    %v1064 = vshrl.u32 %v1063, 7
    %v1065 = vsub.s32 7, %v1064
    %v1066 = vrot.slane %v1013, %v1065
    %1068 = vbcast.lane.b32.xlu0 %v1066, 256
    %v1069 = vpop.permute.xlu0 %1068
    %v1070 = vmul.f32 %v1020, %v877
    %v1071 = vmul.f32 %v1027, %v878
    %v1072 = vmul.f32 %v1034, %v879
    %v1073 = vmul.f32 %v1041, %v880
    %v1074 = vmul.f32 %v1048, %v881
    %v1075 = vmul.f32 %v1055, %v882
    %v1076 = vmul.f32 %v1062, %v883
    %v1077 = vmul.f32 %v1069, %v884
    %vm1078 = vcmask 517376
    %v1079 = vsel %vm1078, %v1070, 0.0
    %v1080 = vsel %vm1078, %v1071, 0.0
    %v1081 = vadd.f32 %v1079, %v1080
    %v1082 = vsel %vm1078, %v1072, 0.0
    %v1083 = vadd.f32 %v1081, %v1082
    %v1084 = vsel %vm1078, %v1073, 0.0
    %v1085 = vadd.f32 %v1083, %v1084
    %v1086 = vsel %vm1078, %v1074, 0.0
    %v1087 = vadd.f32 %v1085, %v1086
    %v1088 = vsel %vm1078, %v1075, 0.0
    %v1089 = vadd.f32 %v1087, %v1088
    %v1090 = vsel %vm1078, %v1076, 0.0
    %v1091 = vadd.f32 %v1089, %v1090
    %v1092 = vsel %vm1078, %v1077, 0.0
    %v1093 = vadd.f32 %v1091, %v1092
    %v1094 = vld [vmem:[%s4] sm:$0xff]
    %v1095 = vld [vmem:[%s4 + $0x8] sm:$0xff]
    %v1096 = vld [vmem:[%s4 + $0x10] sm:$0xff]
    %v1097 = vld [vmem:[%s4 + $0x18] sm:$0xff]
    %v1098 = vld [vmem:[%s5] sm:$0x1]
    %v1100 = vlaneseq
    %v1101 = vshrl.u32 %v1100, 7
    %v1102 = vsub.s32 0, %v1101
    %v1103 = vrot.slane %v1098, %v1102
    %1106 = vrot.lane.b32.xlu0 %v1093, 96
    %v1107 = vpop.permute.xlu0 %1106
    %v1108 = vsel %vm156, %v1107, 0
    %1110 = vmatprep.subr.mxu0 0.0
    %1111 = vmatpush1.msra.mxu0 %v1094
    %1112 = vmatprep.subr.mxu0 0.0
    %1113 = vmatpush1.msra.mxu0 %v1095
    %1114 = vmatprep.subr.mxu0 0.0
    %1115 = vmatpush1.msra.mxu0 %v1096
    %1116 = vmatprep.subr.mxu0 0.0
    %1117 = vmatpush1.msra.mxu0 %v1097
    %1118 = vmatprep.subr.mxu0 0.0
    %1119 = vmatpush1.msra.mxu0 0.0
    %1120 = vmatprep.subr.mxu0 0.0
    %1121 = vmatpush1.msra.mxu0 0.0
    %1122 = vmatprep.subr.mxu0 0.0
    %1123 = vmatpush1.msra.mxu0 0.0
    %1124 = vmatprep.subr.mxu0 0.0
    %1125 = vmatpush1.msra.mxu0 0.0
    %1126 = vmatprep.subr.mxu0 0.0
    %1127 = vmatpush1.msra.mxu0 0.0
    %1128 = vmatprep.subr.mxu0 0.0
    %1129 = vmatpush1.msra.mxu0 0.0
    %1130 = vmatprep.subr.mxu0 0.0
    %1131 = vmatpush1.msra.mxu0 0.0
    %1132 = vmatprep.subr.mxu0 0.0
    %1133 = vmatpush1.msra.mxu0 0.0
    %1134 = vmatprep.subr.mxu0 0.0
    %1135 = vmatpush1.msra.mxu0 0.0
    %1136 = vmatprep.subr.mxu0 0.0
    %1137 = vmatpush1.msra.mxu0 0.0
    %1138 = vmatprep.subr.mxu0 0.0
    %1139 = vmatpush1.msra.mxu0 0.0
    %1140 = vmatprep.subr.mxu0 0.0
    %1141 = vmatpush1.msra.mxu0 0.0
    %1142 = vmatprep.subr.mxu0 0.0
    %1143 = vmatpush1.msra.mxu0 0.0
    %1144 = vmatprep.subr.mxu0 0.0
    %1145 = vmatpush1.msra.mxu0 0.0
    %1146 = vmatprep.subr.mxu0 0.0
    %1147 = vmatpush1.msra.mxu0 0.0
    %1148 = vmatprep.subr.mxu0 0.0
    %1149 = vmatpush1.msra.mxu0 0.0
    %1150 = vmatprep.subr.mxu0 0.0
    %1151 = vmatpush1.msra.mxu0 0.0
    %1152 = vmatprep.subr.mxu0 0.0
    %1153 = vmatpush1.msra.mxu0 0.0
    %1154 = vmatprep.subr.mxu0 0.0
    %1155 = vmatpush1.msra.mxu0 0.0
    %1156 = vmatprep.subr.mxu0 0.0
    %1157 = vmatpush1.msra.mxu0 0.0
    %1158 = vmatprep.subr.mxu0 0.0
    %1159 = vmatpush1.msra.mxu0 0.0
    %1160 = vmatprep.subr.mxu0 0.0
    %1161 = vmatpush1.msra.mxu0 0.0
    %1162 = vmatprep.subr.mxu0 0.0
    %1163 = vmatpush1.msra.mxu0 0.0
    %1164 = vmatprep.subr.mxu0 0.0
    %1165 = vmatpush1.msra.mxu0 0.0
    %1166 = vmatprep.subr.mxu0 0.0
    %1167 = vmatpush1.msra.mxu0 0.0
    %1168 = vmatprep.subr.mxu0 0.0
    %1169 = vmatpush1.msra.mxu0 0.0
    %1170 = vmatprep.subr.mxu0 0.0
    %1171 = vmatpush1.msra.mxu0 0.0
    %1172 = vmatprep.subr.mxu0 0.0
    %1173 = vmatpush1.msra.mxu0 0.0
    %1174 = vmatprep.mubr.f32.mxu0 0.0
    %1175 = vmatmul.mubr.f32.gmra.mrb[0].mxu0 %v1108
    %v1176 = vpop.f32.mrb[0].mxu0
    %v1177 = vadd.f32 %v1103, %v1176
    %v1178 = vpop.f32.mrb[0].mxu0
    %1179 = vdwg.mxu0
    %vm1180 = vcmask 33792
    %1181 = vst.msk [vmem:[#allocation7] sm:$0x3] %vm1180, %v1177
    %1182 = vst.msk [vmem:[%s8] sm:$0xff] %vm994, %v1013
    // Predicated region
    $region34: #{attention_model_q3.1} parent=1 // pred_check
      _
    $region35: #{attention_model_q3.1} parent=1 // pred_check_branch
      %1184 = sbr.rel (0) target = $region37
    $region36: #{attention_model_q3.1} parent=1 // pred_region
      %s1186 = ssub.s32 32, 32
      %1187 = vsyncadd [#allocation6], %s1186
      %s1189 = sshll.u32 [#allocation7], 4
      %s1190 = int_to_ptr.vmem [resolvable:$true] %s1189
      %1192 = dma.vmem_to_hbm [thread:$0]  %s1190, 32, %s7, [#allocation6]
    $region37: #{attention_model_q3.1} parent=1 // pred_fallthru
      _
    // Predicated region
    $region38: #{attention_model_q3.1} parent=1 // pred_check
      _
    $region39: #{attention_model_q3.1} parent=1 // pred_check_branch
      %1194 = sbr.rel (0) target = $region41
    $region40: #{attention_model_q3.1} parent=1 // pred_region
      _
    $region41: #{attention_model_q3.1} parent=1 // pred_fallthru
      _
    // Predicated region
    $region42: #{attention_model_q3.1} parent=1 // pred_check
      _
    $region43: #{attention_model_q3.1} parent=1 // pred_check_branch
      %1196 = sbr.rel (0) target = $region45
    $region44: #{attention_model_q3.1} parent=1 // pred_region
      %1197 = dma.done [#allocation6], 32
    $region45: #{attention_model_q3.1} parent=1 // pred_fallthru
      _
    // Predicated region
    $region46: #{attention_model_q3.1} parent=1 // pred_check
      _
    $region47: #{attention_model_q3.1} parent=1 // pred_check_branch
      %1199 = sbr.rel (0) target = $region49
    $region48: #{attention_model_q3.1} parent=1 // pred_region
      _
    $region49: #{attention_model_q3.1} parent=1 // pred_fallthru
      _
    %1200 = vsyncpa [#allocation5], 1
    %1201 = vsyncpa [#allocation6], 1

</llo_original>
